<compile_context>
chip_gen: v5e
topology: v5e:2x2
jax: 0.10.0
libtpu: 0.0.40
codegen_flags: <defaults>
</compile_context>

<pallas_src>
import jax
import jax.numpy as jnp
from jax.experimental import pallas as pl
from jax.experimental.pallas import tpu as pltpu


def _vmem():
    # whole-array block resident in VMEM (all shapes here are tiny, total << 1 MiB)
    return pl.BlockSpec(memory_space=pltpu.MemorySpace.VMEM)


# ---------------- fused forward kernel ----------------

def _make_forward_kernel(cfg):
    gnn_layers = cfg["gnn_layers"]
    e_layers = cfg["e_layers"]
    use_mlp_out = bool(cfg["mlp_out"])
    inv_d = 1.0 / float(cfg["d_model"])

    def lin(x, w, b):
        return jnp.dot(x, w, preferred_element_type=jnp.float32) + b

    def mlp_layer(x, w, b, g, beta):
        # MLPLayer: Linear -> activation (gelu) -> dropout (identity in eval) -> LayerNorm
        h = lin(x, w, b)
        # TODO(synk): PyTorch nn.GELU defaults to exact erf; tanh approximation used here
        # (activation is configurable in the reference and erf adds lowering risk).
        h = jax.nn.gelu(h)
        # one-pass LayerNorm: mean/var from sum and sum-of-squares (single XLU reduce pair)
        s = jnp.sum(h, axis=-1, keepdims=True)
        ss = jnp.sum(h * h, axis=-1, keepdims=True)
        mu = s * inv_d
        var = ss * inv_d - mu * mu
        hn = (h - mu) * jax.lax.rsqrt(var + 1e-5)
        return hn * g + beta

    def kernel(*refs):
        out_ref = refs[-1]
        it = iter(refs[:-1])

        x_nodes = next(it)[...]        # (N, (label_len+pred_len)*dec_in)
        x_edges = next(it)[...]        # (E, 2)
        s_snd = next(it)[...]          # (E, N) sender one-hot
        s_rcv = next(it)[...]          # (E, N) receiver one-hot
        agg_mat = next(it)[...]        # (N, E) receiver one-hot / degree (mean agg)

        # embeddings
        w, b = next(it)[...], next(it)[...]
        h_nodes = lin(x_nodes, w, b)
        w, b = next(it)[...], next(it)[...]
        h_edges = lin(x_edges, w, b)

        for _ in range(gnn_layers):
            # TODO(synk): exact GraphLayer combination (concat vs. sum, residuals) is not
            # given in the source; assumed sum-combine of edge/sender/receiver features.
            sent = jnp.dot(s_snd, h_nodes, preferred_element_type=jnp.float32)
            recv = jnp.dot(s_rcv, h_nodes, preferred_element_type=jnp.float32)
            e = h_edges + sent + recv
            for _ in range(e_layers):
                w, b, g, beta = next(it)[...], next(it)[...], next(it)[...], next(it)[...]
                e = mlp_layer(e, w, b, g, beta)
            h_edges = e

            # unsorted_mean_agg: mean of incoming edges per node (isolated nodes -> 0)
            agg = jnp.dot(agg_mat, h_edges, preferred_element_type=jnp.float32)
            n = h_nodes + agg
            for _ in range(e_layers):
                w, b, g, beta = next(it)[...], next(it)[...], next(it)[...], next(it)[...]
                n = mlp_layer(n, w, b, g, beta)
            h_nodes = n

        if use_mlp_out:
            w, b, g, beta = next(it)[...], next(it)[...], next(it)[...], next(it)[...]
            h_nodes = mlp_layer(h_nodes, w, b, g, beta)

        w, b = next(it)[...], next(it)[...]
        out_ref[...] = lin(h_nodes, w, b)           # (N, c_out * pred_len)

    return kernel


# ---------------- parameter init (deterministic, torch-Linear-style uniform) ----------------

def init_linear(key, fan_in, fan_out):
    kw, kb = jax.random.split(key)
    bound = 1.0 / jnp.sqrt(jnp.float32(fan_in))
    w = jax.random.uniform(kw, (fan_in, fan_out), jnp.float32, -bound, bound)
    b = jax.random.uniform(kb, (1, fan_out), jnp.float32, -bound, bound)
    return w, b


def init_mlp_layer(key, d_in, d_out):
    w, b = init_linear(key, d_in, d_out)
    g = jnp.ones((1, d_out), jnp.float32)      # LayerNorm gain
    beta = jnp.zeros((1, d_out), jnp.float32)  # LayerNorm bias
    return (w, b, g, beta)


def init_model(key, cfg):
    d = cfg["d_model"]
    keys = jax.random.split(key, 4 + cfg["gnn_layers"] * 2 * cfg["e_layers"])
    ki = iter(keys)
    params = {
        "node_emb": init_linear(next(ki), (cfg["label_len"] + cfg["pred_len"]) * cfg["dec_in"], d),
        "edge_emb": init_linear(next(ki), 2, d),
        "gnn": [],
        "mlp_out": init_mlp_layer(next(ki), d, d) if cfg["mlp_out"] else None,
        "proj": init_linear(next(ki), d, cfg["c_out"] * cfg["pred_len"]),
    }
    for _ in range(cfg["gnn_layers"]):
        edge_mlp = [init_mlp_layer(next(ki), d, d) for _ in range(cfg["e_layers"])]
        node_mlp = [init_mlp_layer(next(ki), d, d) for _ in range(cfg["e_layers"])]
        params["gnn"].append({"edge_mlp": edge_mlp, "node_mlp": node_mlp})
    return params


def _flatten_params(params):
    flat = list(params["node_emb"]) + list(params["edge_emb"])
    for gl in params["gnn"]:
        for lp in gl["edge_mlp"]:
            flat += list(lp)
        for lp in gl["node_mlp"]:
            flat += list(lp)
    if params["mlp_out"] is not None:
        flat += list(params["mlp_out"])
    flat += list(params["proj"])
    return flat


# ---------------- model forward (single fused pallas_call) ----------------

def model_forward(params, nodes, edges, senders, receivers, cfg):
    N = nodes.shape[0]

    # x_dec.nodes.reshape(num_nodes, -1)
    x_nodes = nodes.reshape(N, -1).astype(jnp.float32)
    x_edges = edges.astype(jnp.float32)

    # graph-structure matrices (built once, consumed by MXU matmuls inside the kernel)
    s_snd = jax.nn.one_hot(senders, N, dtype=jnp.float32)      # (E, N)
    s_rcv = jax.nn.one_hot(receivers, N, dtype=jnp.float32)    # (E, N)
    deg = jnp.maximum(jnp.sum(s_rcv, axis=0, keepdims=True), 1.0)   # (1, N)
    agg_mat = s_rcv.T / deg.T                                  # (N, E), mean aggregation

    inputs = [x_nodes, x_edges, s_snd, s_rcv, agg_mat] + _flatten_params(params)

    out = pl.pallas_call(
        _make_forward_kernel(cfg),
        out_shape=jax.ShapeDtypeStruct((N, cfg["c_out"] * cfg["pred_len"]), jnp.float32),
        in_specs=[_vmem()] * len(inputs),
        out_specs=_vmem(),
    )(*inputs)

    # nodes.view(N, pred_len, c_out)
    return out.reshape(N, cfg["pred_len"], cfg["c_out"])


# ---------------- main ----------------

if __name__ == "__main__":
    cfg = dict(
        label_len=4, pred_len=4, dec_in=2, d_model=32, c_out=2,
        e_layers=2, gnn_layers=2, mlp_out=True,
    )
    N, E = 8, 16

    key = jax.random.PRNGKey(0)
    k_nodes, k_edges, k_snd, k_rcv, k_params = jax.random.split(key, 5)

    # x_dec.nodes: (N, label_len + pred_len, dec_in); x_dec.edges: (E, 2)
    nodes = jax.random.normal(
        k_nodes, (N, cfg["label_len"] + cfg["pred_len"], cfg["dec_in"]), jnp.float32
    )
    edges = jax.random.normal(k_edges, (E, 2), jnp.float32)
    senders = jax.random.randint(k_snd, (E,), 0, N)
    receivers = jax.random.randint(k_rcv, (E,), 0, N)

    params = init_model(k_params, cfg)

    fwd = jax.jit(lambda p, n, e, s, r: model_forward(p, n, e, s, r, cfg))
    out = fwd(params, nodes, edges, senders, receivers)
    out = jax.block_until_ready(out)
    assert out.shape == (N, cfg["pred_len"], cfg["c_out"])
    print("KERNEL_OK")
</pallas_src>

<mosaic_0001>
module attributes {stable_mosaic.version = 11 : i64} {
  func.func @kernel(%arg0: memref<8x16xf32, #tpu.memory_space<vmem>>, %arg1: memref<16x2xf32, #tpu.memory_space<vmem>>, %arg2: memref<16x8xf32, #tpu.memory_space<vmem>>, %arg3: memref<16x8xf32, #tpu.memory_space<vmem>>, %arg4: memref<8x16xf32, #tpu.memory_space<vmem>>, %arg5: memref<16x32xf32, #tpu.memory_space<vmem>>, %arg6: memref<1x32xf32, #tpu.memory_space<vmem>>, %arg7: memref<2x32xf32, #tpu.memory_space<vmem>>, %arg8: memref<1x32xf32, #tpu.memory_space<vmem>>, %arg9: memref<32x32xf32, #tpu.memory_space<vmem>>, %arg10: memref<1x32xf32, #tpu.memory_space<vmem>>, %arg11: memref<1x32xf32, #tpu.memory_space<vmem>>, %arg12: memref<1x32xf32, #tpu.memory_space<vmem>>, %arg13: memref<32x32xf32, #tpu.memory_space<vmem>>, %arg14: memref<1x32xf32, #tpu.memory_space<vmem>>, %arg15: memref<1x32xf32, #tpu.memory_space<vmem>>, %arg16: memref<1x32xf32, #tpu.memory_space<vmem>>, %arg17: memref<32x32xf32, #tpu.memory_space<vmem>>, %arg18: memref<1x32xf32, #tpu.memory_space<vmem>>, %arg19: memref<1x32xf32, #tpu.memory_space<vmem>>, %arg20: memref<1x32xf32, #tpu.memory_space<vmem>>, %arg21: memref<32x32xf32, #tpu.memory_space<vmem>>, %arg22: memref<1x32xf32, #tpu.memory_space<vmem>>, %arg23: memref<1x32xf32, #tpu.memory_space<vmem>>, %arg24: memref<1x32xf32, #tpu.memory_space<vmem>>, %arg25: memref<32x32xf32, #tpu.memory_space<vmem>>, %arg26: memref<1x32xf32, #tpu.memory_space<vmem>>, %arg27: memref<1x32xf32, #tpu.memory_space<vmem>>, %arg28: memref<1x32xf32, #tpu.memory_space<vmem>>, %arg29: memref<32x32xf32, #tpu.memory_space<vmem>>, %arg30: memref<1x32xf32, #tpu.memory_space<vmem>>, %arg31: memref<1x32xf32, #tpu.memory_space<vmem>>, %arg32: memref<1x32xf32, #tpu.memory_space<vmem>>, %arg33: memref<32x32xf32, #tpu.memory_space<vmem>>, %arg34: memref<1x32xf32, #tpu.memory_space<vmem>>, %arg35: memref<1x32xf32, #tpu.memory_space<vmem>>, %arg36: memref<1x32xf32, #tpu.memory_space<vmem>>, %arg37: memref<32x32xf32, #tpu.memory_space<vmem>>, %arg38: memref<1x32xf32, #tpu.memory_space<vmem>>, %arg39: memref<1x32xf32, #tpu.memory_space<vmem>>, %arg40: memref<1x32xf32, #tpu.memory_space<vmem>>, %arg41: memref<32x32xf32, #tpu.memory_space<vmem>>, %arg42: memref<1x32xf32, #tpu.memory_space<vmem>>, %arg43: memref<1x32xf32, #tpu.memory_space<vmem>>, %arg44: memref<1x32xf32, #tpu.memory_space<vmem>>, %arg45: memref<32x8xf32, #tpu.memory_space<vmem>>, %arg46: memref<1x8xf32, #tpu.memory_space<vmem>>, %arg47: memref<8x8xf32, #tpu.memory_space<vmem>>) attributes {dimension_semantics = [], scalar_prefetch = 0 : i64, scratch_operands = 0 : i64, tpu.core_type = #tpu.core_type<tc>} {
    %c0 = arith.constant 0 : index
    %c0_0 = arith.constant 0 : index
    %0 = vector.load %arg0[%c0, %c0_0] : memref<8x16xf32, #tpu.memory_space<vmem>>, vector<8x16xf32>
    %c0_1 = arith.constant 0 : index
    %c0_2 = arith.constant 0 : index
    %1 = vector.load %arg1[%c0_1, %c0_2] : memref<16x2xf32, #tpu.memory_space<vmem>>, vector<16x2xf32>
    %c0_3 = arith.constant 0 : index
    %c0_4 = arith.constant 0 : index
    %2 = vector.load %arg2[%c0_3, %c0_4] : memref<16x8xf32, #tpu.memory_space<vmem>>, vector<16x8xf32>
    %c0_5 = arith.constant 0 : index
    %c0_6 = arith.constant 0 : index
    %3 = vector.load %arg3[%c0_5, %c0_6] : memref<16x8xf32, #tpu.memory_space<vmem>>, vector<16x8xf32>
    %c0_7 = arith.constant 0 : index
    %c0_8 = arith.constant 0 : index
    %4 = vector.load %arg4[%c0_7, %c0_8] : memref<8x16xf32, #tpu.memory_space<vmem>>, vector<8x16xf32>
    %c0_9 = arith.constant 0 : index
    %c0_10 = arith.constant 0 : index
    %5 = vector.load %arg5[%c0_9, %c0_10] : memref<16x32xf32, #tpu.memory_space<vmem>>, vector<16x32xf32>
    %c0_11 = arith.constant 0 : index
    %c0_12 = arith.constant 0 : index
    %6 = vector.load %arg6[%c0_11, %c0_12] : memref<1x32xf32, #tpu.memory_space<vmem>>, vector<1x32xf32>
    %cst = arith.constant dense<0.000000e+00> : vector<8x32xf32>
    %7 = tpu.matmul %0, %5, %cst {dimension_numbers = #tpu.dot_dimension_numbers<[1], [0], [0], [1], [0, 0, 1, 1], [], []>} : vector<8x16xf32>, vector<16x32xf32>, vector<8x32xf32> -> vector<8x32xf32>
    %8 = vector.broadcast %6 : vector<1x32xf32> to vector<8x32xf32>
    %9 = arith.addf %7, %8 : vector<8x32xf32>
    %c0_13 = arith.constant 0 : index
    %c0_14 = arith.constant 0 : index
    %10 = vector.load %arg7[%c0_13, %c0_14] : memref<2x32xf32, #tpu.memory_space<vmem>>, vector<2x32xf32>
    %c0_15 = arith.constant 0 : index
    %c0_16 = arith.constant 0 : index
    %11 = vector.load %arg8[%c0_15, %c0_16] : memref<1x32xf32, #tpu.memory_space<vmem>>, vector<1x32xf32>
    %cst_17 = arith.constant dense<0.000000e+00> : vector<16x32xf32>
    %12 = tpu.matmul %1, %10, %cst_17 {dimension_numbers = #tpu.dot_dimension_numbers<[1], [0], [0], [1], [0, 0, 1, 1], [], []>} : vector<16x2xf32>, vector<2x32xf32>, vector<16x32xf32> -> vector<16x32xf32>
    %13 = vector.broadcast %11 : vector<1x32xf32> to vector<16x32xf32>
    %14 = arith.addf %12, %13 : vector<16x32xf32>
    %cst_18 = arith.constant dense<0.000000e+00> : vector<16x32xf32>
    %15 = tpu.matmul %2, %9, %cst_18 {dimension_numbers = #tpu.dot_dimension_numbers<[1], [0], [0], [1], [0, 0, 1, 1], [], []>} : vector<16x8xf32>, vector<8x32xf32>, vector<16x32xf32> -> vector<16x32xf32>
    %cst_19 = arith.constant dense<0.000000e+00> : vector<16x32xf32>
    %16 = tpu.matmul %3, %9, %cst_19 {dimension_numbers = #tpu.dot_dimension_numbers<[1], [0], [0], [1], [0, 0, 1, 1], [], []>} : vector<16x8xf32>, vector<8x32xf32>, vector<16x32xf32> -> vector<16x32xf32>
    %17 = arith.addf %14, %15 : vector<16x32xf32>
    %18 = arith.addf %17, %16 : vector<16x32xf32>
    %c0_20 = arith.constant 0 : index
    %c0_21 = arith.constant 0 : index
    %19 = vector.load %arg9[%c0_20, %c0_21] : memref<32x32xf32, #tpu.memory_space<vmem>>, vector<32x32xf32>
    %c0_22 = arith.constant 0 : index
    %c0_23 = arith.constant 0 : index
    %20 = vector.load %arg10[%c0_22, %c0_23] : memref<1x32xf32, #tpu.memory_space<vmem>>, vector<1x32xf32>
    %c0_24 = arith.constant 0 : index
    %c0_25 = arith.constant 0 : index
    %21 = vector.load %arg11[%c0_24, %c0_25] : memref<1x32xf32, #tpu.memory_space<vmem>>, vector<1x32xf32>
    %c0_26 = arith.constant 0 : index
    %c0_27 = arith.constant 0 : index
    %22 = vector.load %arg12[%c0_26, %c0_27] : memref<1x32xf32, #tpu.memory_space<vmem>>, vector<1x32xf32>
    %cst_28 = arith.constant dense<0.000000e+00> : vector<16x32xf32>
    %23 = tpu.matmul %18, %19, %cst_28 {dimension_numbers = #tpu.dot_dimension_numbers<[1], [0], [0], [1], [0, 0, 1, 1], [], []>} : vector<16x32xf32>, vector<32x32xf32>, vector<16x32xf32> -> vector<16x32xf32>
    %24 = vector.broadcast %20 : vector<1x32xf32> to vector<16x32xf32>
    %25 = arith.addf %23, %24 : vector<16x32xf32>
    %26 = arith.mulf %25, %25 : vector<16x32xf32>
    %27 = arith.mulf %25, %26 : vector<16x32xf32>
    %cst_29 = arith.constant 4.471500e-02 : f32
    %28 = vector.broadcast %cst_29 : f32 to vector<16x32xf32>
    %29 = arith.mulf %28, %27 : vector<16x32xf32>
    %30 = arith.addf %25, %29 : vector<16x32xf32>
    %cst_30 = arith.constant 0.797884583 : f32
    %31 = vector.broadcast %cst_30 : f32 to vector<16x32xf32>
    %32 = arith.mulf %31, %30 : vector<16x32xf32>
    %33 = math.tanh %32 : vector<16x32xf32>
    %cst_31 = arith.constant 1.000000e+00 : f32
    %34 = vector.broadcast %cst_31 : f32 to vector<16x32xf32>
    %35 = arith.addf %34, %33 : vector<16x32xf32>
    %cst_32 = arith.constant 5.000000e-01 : f32
    %36 = vector.broadcast %cst_32 : f32 to vector<16x32xf32>
    %37 = arith.mulf %36, %35 : vector<16x32xf32>
    %38 = arith.mulf %25, %37 : vector<16x32xf32>
    %cst_33 = arith.constant dense<0.000000e+00> : vector<16xf32>
    %39 = vector.multi_reduction <add>, %38, %cst_33 [1] : vector<16x32xf32> to vector<16xf32>
    %40 = vector.shape_cast %39 : vector<16xf32> to vector<16x1xf32>
    %41 = arith.mulf %38, %38 : vector<16x32xf32>
    %cst_34 = arith.constant dense<0.000000e+00> : vector<16xf32>
    %42 = vector.multi_reduction <add>, %41, %cst_34 [1] : vector<16x32xf32> to vector<16xf32>
    %43 = vector.shape_cast %42 : vector<16xf32> to vector<16x1xf32>
    %cst_35 = arith.constant 3.125000e-02 : f32
    %44 = vector.broadcast %cst_35 : f32 to vector<16x1xf32>
    %45 = arith.mulf %40, %44 : vector<16x1xf32>
    %cst_36 = arith.constant 3.125000e-02 : f32
    %46 = vector.broadcast %cst_36 : f32 to vector<16x1xf32>
    %47 = arith.mulf %43, %46 : vector<16x1xf32>
    %48 = arith.mulf %45, %45 : vector<16x1xf32>
    %49 = arith.subf %47, %48 : vector<16x1xf32>
    %50 = vector.broadcast %45 : vector<16x1xf32> to vector<16x32xf32>
    %51 = arith.subf %38, %50 : vector<16x32xf32>
    %cst_37 = arith.constant 9.99999974E-6 : f32
    %52 = vector.broadcast %cst_37 : f32 to vector<16x1xf32>
    %53 = arith.addf %49, %52 : vector<16x1xf32>
    %54 = math.rsqrt %53 : vector<16x1xf32>
    %55 = vector.broadcast %54 : vector<16x1xf32> to vector<16x32xf32>
    %56 = arith.mulf %51, %55 : vector<16x32xf32>
    %57 = vector.broadcast %21 : vector<1x32xf32> to vector<16x32xf32>
    %58 = arith.mulf %56, %57 : vector<16x32xf32>
    %59 = vector.broadcast %22 : vector<1x32xf32> to vector<16x32xf32>
    %60 = arith.addf %58, %59 : vector<16x32xf32>
    %c0_38 = arith.constant 0 : index
    %c0_39 = arith.constant 0 : index
    %61 = vector.load %arg13[%c0_38, %c0_39] : memref<32x32xf32, #tpu.memory_space<vmem>>, vector<32x32xf32>
    %c0_40 = arith.constant 0 : index
    %c0_41 = arith.constant 0 : index
    %62 = vector.load %arg14[%c0_40, %c0_41] : memref<1x32xf32, #tpu.memory_space<vmem>>, vector<1x32xf32>
    %c0_42 = arith.constant 0 : index
    %c0_43 = arith.constant 0 : index
    %63 = vector.load %arg15[%c0_42, %c0_43] : memref<1x32xf32, #tpu.memory_space<vmem>>, vector<1x32xf32>
    %c0_44 = arith.constant 0 : index
    %c0_45 = arith.constant 0 : index
    %64 = vector.load %arg16[%c0_44, %c0_45] : memref<1x32xf32, #tpu.memory_space<vmem>>, vector<1x32xf32>
    %cst_46 = arith.constant dense<0.000000e+00> : vector<16x32xf32>
    %65 = tpu.matmul %60, %61, %cst_46 {dimension_numbers = #tpu.dot_dimension_numbers<[1], [0], [0], [1], [0, 0, 1, 1], [], []>} : vector<16x32xf32>, vector<32x32xf32>, vector<16x32xf32> -> vector<16x32xf32>
    %66 = vector.broadcast %62 : vector<1x32xf32> to vector<16x32xf32>
    %67 = arith.addf %65, %66 : vector<16x32xf32>
    %68 = arith.mulf %67, %67 : vector<16x32xf32>
    %69 = arith.mulf %67, %68 : vector<16x32xf32>
    %cst_47 = arith.constant 4.471500e-02 : f32
    %70 = vector.broadcast %cst_47 : f32 to vector<16x32xf32>
    %71 = arith.mulf %70, %69 : vector<16x32xf32>
    %72 = arith.addf %67, %71 : vector<16x32xf32>
    %cst_48 = arith.constant 0.797884583 : f32
    %73 = vector.broadcast %cst_48 : f32 to vector<16x32xf32>
    %74 = arith.mulf %73, %72 : vector<16x32xf32>
    %75 = math.tanh %74 : vector<16x32xf32>
    %cst_49 = arith.constant 1.000000e+00 : f32
    %76 = vector.broadcast %cst_49 : f32 to vector<16x32xf32>
    %77 = arith.addf %76, %75 : vector<16x32xf32>
    %cst_50 = arith.constant 5.000000e-01 : f32
    %78 = vector.broadcast %cst_50 : f32 to vector<16x32xf32>
    %79 = arith.mulf %78, %77 : vector<16x32xf32>
    %80 = arith.mulf %67, %79 : vector<16x32xf32>
    %cst_51 = arith.constant dense<0.000000e+00> : vector<16xf32>
    %81 = vector.multi_reduction <add>, %80, %cst_51 [1] : vector<16x32xf32> to vector<16xf32>
    %82 = vector.shape_cast %81 : vector<16xf32> to vector<16x1xf32>
    %83 = arith.mulf %80, %80 : vector<16x32xf32>
    %cst_52 = arith.constant dense<0.000000e+00> : vector<16xf32>
    %84 = vector.multi_reduction <add>, %83, %cst_52 [1] : vector<16x32xf32> to vector<16xf32>
    %85 = vector.shape_cast %84 : vector<16xf32> to vector<16x1xf32>
    %cst_53 = arith.constant 3.125000e-02 : f32
    %86 = vector.broadcast %cst_53 : f32 to vector<16x1xf32>
    %87 = arith.mulf %82, %86 : vector<16x1xf32>
    %cst_54 = arith.constant 3.125000e-02 : f32
    %88 = vector.broadcast %cst_54 : f32 to vector<16x1xf32>
    %89 = arith.mulf %85, %88 : vector<16x1xf32>
    %90 = arith.mulf %87, %87 : vector<16x1xf32>
    %91 = arith.subf %89, %90 : vector<16x1xf32>
    %92 = vector.broadcast %87 : vector<16x1xf32> to vector<16x32xf32>
    %93 = arith.subf %80, %92 : vector<16x32xf32>
    %cst_55 = arith.constant 9.99999974E-6 : f32
    %94 = vector.broadcast %cst_55 : f32 to vector<16x1xf32>
    %95 = arith.addf %91, %94 : vector<16x1xf32>
    %96 = math.rsqrt %95 : vector<16x1xf32>
    %97 = vector.broadcast %96 : vector<16x1xf32> to vector<16x32xf32>
    %98 = arith.mulf %93, %97 : vector<16x32xf32>
    %99 = vector.broadcast %63 : vector<1x32xf32> to vector<16x32xf32>
    %100 = arith.mulf %98, %99 : vector<16x32xf32>
    %101 = vector.broadcast %64 : vector<1x32xf32> to vector<16x32xf32>
    %102 = arith.addf %100, %101 : vector<16x32xf32>
    %cst_56 = arith.constant dense<0.000000e+00> : vector<8x32xf32>
    %103 = tpu.matmul %4, %102, %cst_56 {dimension_numbers = #tpu.dot_dimension_numbers<[1], [0], [0], [1], [0, 0, 1, 1], [], []>} : vector<8x16xf32>, vector<16x32xf32>, vector<8x32xf32> -> vector<8x32xf32>
    %104 = arith.addf %9, %103 : vector<8x32xf32>
    %c0_57 = arith.constant 0 : index
    %c0_58 = arith.constant 0 : index
    %105 = vector.load %arg17[%c0_57, %c0_58] : memref<32x32xf32, #tpu.memory_space<vmem>>, vector<32x32xf32>
    %c0_59 = arith.constant 0 : index
    %c0_60 = arith.constant 0 : index
    %106 = vector.load %arg18[%c0_59, %c0_60] : memref<1x32xf32, #tpu.memory_space<vmem>>, vector<1x32xf32>
    %c0_61 = arith.constant 0 : index
    %c0_62 = arith.constant 0 : index
    %107 = vector.load %arg19[%c0_61, %c0_62] : memref<1x32xf32, #tpu.memory_space<vmem>>, vector<1x32xf32>
    %c0_63 = arith.constant 0 : index
    %c0_64 = arith.constant 0 : index
    %108 = vector.load %arg20[%c0_63, %c0_64] : memref<1x32xf32, #tpu.memory_space<vmem>>, vector<1x32xf32>
    %cst_65 = arith.constant dense<0.000000e+00> : vector<8x32xf32>
    %109 = tpu.matmul %104, %105, %cst_65 {dimension_numbers = #tpu.dot_dimension_numbers<[1], [0], [0], [1], [0, 0, 1, 1], [], []>} : vector<8x32xf32>, vector<32x32xf32>, vector<8x32xf32> -> vector<8x32xf32>
    %110 = vector.broadcast %106 : vector<1x32xf32> to vector<8x32xf32>
    %111 = arith.addf %109, %110 : vector<8x32xf32>
    %112 = arith.mulf %111, %111 : vector<8x32xf32>
    %113 = arith.mulf %111, %112 : vector<8x32xf32>
    %cst_66 = arith.constant 4.471500e-02 : f32
    %114 = vector.broadcast %cst_66 : f32 to vector<8x32xf32>
    %115 = arith.mulf %114, %113 : vector<8x32xf32>
    %116 = arith.addf %111, %115 : vector<8x32xf32>
    %cst_67 = arith.constant 0.797884583 : f32
    %117 = vector.broadcast %cst_67 : f32 to vector<8x32xf32>
    %118 = arith.mulf %117, %116 : vector<8x32xf32>
    %119 = math.tanh %118 : vector<8x32xf32>
    %cst_68 = arith.constant 1.000000e+00 : f32
    %120 = vector.broadcast %cst_68 : f32 to vector<8x32xf32>
    %121 = arith.addf %120, %119 : vector<8x32xf32>
    %cst_69 = arith.constant 5.000000e-01 : f32
    %122 = vector.broadcast %cst_69 : f32 to vector<8x32xf32>
    %123 = arith.mulf %122, %121 : vector<8x32xf32>
    %124 = arith.mulf %111, %123 : vector<8x32xf32>
    %cst_70 = arith.constant dense<0.000000e+00> : vector<8xf32>
    %125 = vector.multi_reduction <add>, %124, %cst_70 [1] : vector<8x32xf32> to vector<8xf32>
    %126 = vector.shape_cast %125 : vector<8xf32> to vector<8x1xf32>
    %127 = arith.mulf %124, %124 : vector<8x32xf32>
    %cst_71 = arith.constant dense<0.000000e+00> : vector<8xf32>
    %128 = vector.multi_reduction <add>, %127, %cst_71 [1] : vector<8x32xf32> to vector<8xf32>
    %129 = vector.shape_cast %128 : vector<8xf32> to vector<8x1xf32>
    %cst_72 = arith.constant 3.125000e-02 : f32
    %130 = vector.broadcast %cst_72 : f32 to vector<8x1xf32>
    %131 = arith.mulf %126, %130 : vector<8x1xf32>
    %cst_73 = arith.constant 3.125000e-02 : f32
    %132 = vector.broadcast %cst_73 : f32 to vector<8x1xf32>
    %133 = arith.mulf %129, %132 : vector<8x1xf32>
    %134 = arith.mulf %131, %131 : vector<8x1xf32>
    %135 = arith.subf %133, %134 : vector<8x1xf32>
    %136 = vector.broadcast %131 : vector<8x1xf32> to vector<8x32xf32>
    %137 = arith.subf %124, %136 : vector<8x32xf32>
    %cst_74 = arith.constant 9.99999974E-6 : f32
    %138 = vector.broadcast %cst_74 : f32 to vector<8x1xf32>
    %139 = arith.addf %135, %138 : vector<8x1xf32>
    %140 = math.rsqrt %139 : vector<8x1xf32>
    %141 = vector.broadcast %140 : vector<8x1xf32> to vector<8x32xf32>
    %142 = arith.mulf %137, %141 : vector<8x32xf32>
    %143 = vector.broadcast %107 : vector<1x32xf32> to vector<8x32xf32>
    %144 = arith.mulf %142, %143 : vector<8x32xf32>
    %145 = vector.broadcast %108 : vector<1x32xf32> to vector<8x32xf32>
    %146 = arith.addf %144, %145 : vector<8x32xf32>
    %c0_75 = arith.constant 0 : index
    %c0_76 = arith.constant 0 : index
    %147 = vector.load %arg21[%c0_75, %c0_76] : memref<32x32xf32, #tpu.memory_space<vmem>>, vector<32x32xf32>
    %c0_77 = arith.constant 0 : index
    %c0_78 = arith.constant 0 : index
    %148 = vector.load %arg22[%c0_77, %c0_78] : memref<1x32xf32, #tpu.memory_space<vmem>>, vector<1x32xf32>
    %c0_79 = arith.constant 0 : index
    %c0_80 = arith.constant 0 : index
    %149 = vector.load %arg23[%c0_79, %c0_80] : memref<1x32xf32, #tpu.memory_space<vmem>>, vector<1x32xf32>
    %c0_81 = arith.constant 0 : index
    %c0_82 = arith.constant 0 : index
    %150 = vector.load %arg24[%c0_81, %c0_82] : memref<1x32xf32, #tpu.memory_space<vmem>>, vector<1x32xf32>
    %cst_83 = arith.constant dense<0.000000e+00> : vector<8x32xf32>
    %151 = tpu.matmul %146, %147, %cst_83 {dimension_numbers = #tpu.dot_dimension_numbers<[1], [0], [0], [1], [0, 0, 1, 1], [], []>} : vector<8x32xf32>, vector<32x32xf32>, vector<8x32xf32> -> vector<8x32xf32>
    %152 = vector.broadcast %148 : vector<1x32xf32> to vector<8x32xf32>
    %153 = arith.addf %151, %152 : vector<8x32xf32>
    %154 = arith.mulf %153, %153 : vector<8x32xf32>
    %155 = arith.mulf %153, %154 : vector<8x32xf32>
    %cst_84 = arith.constant 4.471500e-02 : f32
    %156 = vector.broadcast %cst_84 : f32 to vector<8x32xf32>
    %157 = arith.mulf %156, %155 : vector<8x32xf32>
    %158 = arith.addf %153, %157 : vector<8x32xf32>
    %cst_85 = arith.constant 0.797884583 : f32
    %159 = vector.broadcast %cst_85 : f32 to vector<8x32xf32>
    %160 = arith.mulf %159, %158 : vector<8x32xf32>
    %161 = math.tanh %160 : vector<8x32xf32>
    %cst_86 = arith.constant 1.000000e+00 : f32
    %162 = vector.broadcast %cst_86 : f32 to vector<8x32xf32>
    %163 = arith.addf %162, %161 : vector<8x32xf32>
    %cst_87 = arith.constant 5.000000e-01 : f32
    %164 = vector.broadcast %cst_87 : f32 to vector<8x32xf32>
    %165 = arith.mulf %164, %163 : vector<8x32xf32>
    %166 = arith.mulf %153, %165 : vector<8x32xf32>
    %cst_88 = arith.constant dense<0.000000e+00> : vector<8xf32>
    %167 = vector.multi_reduction <add>, %166, %cst_88 [1] : vector<8x32xf32> to vector<8xf32>
    %168 = vector.shape_cast %167 : vector<8xf32> to vector<8x1xf32>
    %169 = arith.mulf %166, %166 : vector<8x32xf32>
    %cst_89 = arith.constant dense<0.000000e+00> : vector<8xf32>
    %170 = vector.multi_reduction <add>, %169, %cst_89 [1] : vector<8x32xf32> to vector<8xf32>
    %171 = vector.shape_cast %170 : vector<8xf32> to vector<8x1xf32>
    %cst_90 = arith.constant 3.125000e-02 : f32
    %172 = vector.broadcast %cst_90 : f32 to vector<8x1xf32>
    %173 = arith.mulf %168, %172 : vector<8x1xf32>
    %cst_91 = arith.constant 3.125000e-02 : f32
    %174 = vector.broadcast %cst_91 : f32 to vector<8x1xf32>
    %175 = arith.mulf %171, %174 : vector<8x1xf32>
    %176 = arith.mulf %173, %173 : vector<8x1xf32>
    %177 = arith.subf %175, %176 : vector<8x1xf32>
    %178 = vector.broadcast %173 : vector<8x1xf32> to vector<8x32xf32>
    %179 = arith.subf %166, %178 : vector<8x32xf32>
    %cst_92 = arith.constant 9.99999974E-6 : f32
    %180 = vector.broadcast %cst_92 : f32 to vector<8x1xf32>
    %181 = arith.addf %177, %180 : vector<8x1xf32>
    %182 = math.rsqrt %181 : vector<8x1xf32>
    %183 = vector.broadcast %182 : vector<8x1xf32> to vector<8x32xf32>
    %184 = arith.mulf %179, %183 : vector<8x32xf32>
    %185 = vector.broadcast %149 : vector<1x32xf32> to vector<8x32xf32>
    %186 = arith.mulf %184, %185 : vector<8x32xf32>
    %187 = vector.broadcast %150 : vector<1x32xf32> to vector<8x32xf32>
    %188 = arith.addf %186, %187 : vector<8x32xf32>
    %cst_93 = arith.constant dense<0.000000e+00> : vector<16x32xf32>
    %189 = tpu.matmul %2, %188, %cst_93 {dimension_numbers = #tpu.dot_dimension_numbers<[1], [0], [0], [1], [0, 0, 1, 1], [], []>} : vector<16x8xf32>, vector<8x32xf32>, vector<16x32xf32> -> vector<16x32xf32>
    %cst_94 = arith.constant dense<0.000000e+00> : vector<16x32xf32>
    %190 = tpu.matmul %3, %188, %cst_94 {dimension_numbers = #tpu.dot_dimension_numbers<[1], [0], [0], [1], [0, 0, 1, 1], [], []>} : vector<16x8xf32>, vector<8x32xf32>, vector<16x32xf32> -> vector<16x32xf32>
    %191 = arith.addf %102, %189 : vector<16x32xf32>
    %192 = arith.addf %191, %190 : vector<16x32xf32>
    %c0_95 = arith.constant 0 : index
    %c0_96 = arith.constant 0 : index
    %193 = vector.load %arg25[%c0_95, %c0_96] : memref<32x32xf32, #tpu.memory_space<vmem>>, vector<32x32xf32>
    %c0_97 = arith.constant 0 : index
    %c0_98 = arith.constant 0 : index
    %194 = vector.load %arg26[%c0_97, %c0_98] : memref<1x32xf32, #tpu.memory_space<vmem>>, vector<1x32xf32>
    %c0_99 = arith.constant 0 : index
    %c0_100 = arith.constant 0 : index
    %195 = vector.load %arg27[%c0_99, %c0_100] : memref<1x32xf32, #tpu.memory_space<vmem>>, vector<1x32xf32>
    %c0_101 = arith.constant 0 : index
    %c0_102 = arith.constant 0 : index
    %196 = vector.load %arg28[%c0_101, %c0_102] : memref<1x32xf32, #tpu.memory_space<vmem>>, vector<1x32xf32>
    %cst_103 = arith.constant dense<0.000000e+00> : vector<16x32xf32>
    %197 = tpu.matmul %192, %193, %cst_103 {dimension_numbers = #tpu.dot_dimension_numbers<[1], [0], [0], [1], [0, 0, 1, 1], [], []>} : vector<16x32xf32>, vector<32x32xf32>, vector<16x32xf32> -> vector<16x32xf32>
    %198 = vector.broadcast %194 : vector<1x32xf32> to vector<16x32xf32>
    %199 = arith.addf %197, %198 : vector<16x32xf32>
    %200 = arith.mulf %199, %199 : vector<16x32xf32>
    %201 = arith.mulf %199, %200 : vector<16x32xf32>
    %cst_104 = arith.constant 4.471500e-02 : f32
    %202 = vector.broadcast %cst_104 : f32 to vector<16x32xf32>
    %203 = arith.mulf %202, %201 : vector<16x32xf32>
    %204 = arith.addf %199, %203 : vector<16x32xf32>
    %cst_105 = arith.constant 0.797884583 : f32
    %205 = vector.broadcast %cst_105 : f32 to vector<16x32xf32>
    %206 = arith.mulf %205, %204 : vector<16x32xf32>
    %207 = math.tanh %206 : vector<16x32xf32>
    %cst_106 = arith.constant 1.000000e+00 : f32
    %208 = vector.broadcast %cst_106 : f32 to vector<16x32xf32>
    %209 = arith.addf %208, %207 : vector<16x32xf32>
    %cst_107 = arith.constant 5.000000e-01 : f32
    %210 = vector.broadcast %cst_107 : f32 to vector<16x32xf32>
    %211 = arith.mulf %210, %209 : vector<16x32xf32>
    %212 = arith.mulf %199, %211 : vector<16x32xf32>
    %cst_108 = arith.constant dense<0.000000e+00> : vector<16xf32>
    %213 = vector.multi_reduction <add>, %212, %cst_108 [1] : vector<16x32xf32> to vector<16xf32>
    %214 = vector.shape_cast %213 : vector<16xf32> to vector<16x1xf32>
    %215 = arith.mulf %212, %212 : vector<16x32xf32>
    %cst_109 = arith.constant dense<0.000000e+00> : vector<16xf32>
    %216 = vector.multi_reduction <add>, %215, %cst_109 [1] : vector<16x32xf32> to vector<16xf32>
    %217 = vector.shape_cast %216 : vector<16xf32> to vector<16x1xf32>
    %cst_110 = arith.constant 3.125000e-02 : f32
    %218 = vector.broadcast %cst_110 : f32 to vector<16x1xf32>
    %219 = arith.mulf %214, %218 : vector<16x1xf32>
    %cst_111 = arith.constant 3.125000e-02 : f32
    %220 = vector.broadcast %cst_111 : f32 to vector<16x1xf32>
    %221 = arith.mulf %217, %220 : vector<16x1xf32>
    %222 = arith.mulf %219, %219 : vector<16x1xf32>
    %223 = arith.subf %221, %222 : vector<16x1xf32>
    %224 = vector.broadcast %219 : vector<16x1xf32> to vector<16x32xf32>
    %225 = arith.subf %212, %224 : vector<16x32xf32>
    %cst_112 = arith.constant 9.99999974E-6 : f32
    %226 = vector.broadcast %cst_112 : f32 to vector<16x1xf32>
    %227 = arith.addf %223, %226 : vector<16x1xf32>
    %228 = math.rsqrt %227 : vector<16x1xf32>
    %229 = vector.broadcast %228 : vector<16x1xf32> to vector<16x32xf32>
    %230 = arith.mulf %225, %229 : vector<16x32xf32>
    %231 = vector.broadcast %195 : vector<1x32xf32> to vector<16x32xf32>
    %232 = arith.mulf %230, %231 : vector<16x32xf32>
    %233 = vector.broadcast %196 : vector<1x32xf32> to vector<16x32xf32>
    %234 = arith.addf %232, %233 : vector<16x32xf32>
    %c0_113 = arith.constant 0 : index
    %c0_114 = arith.constant 0 : index
    %235 = vector.load %arg29[%c0_113, %c0_114] : memref<32x32xf32, #tpu.memory_space<vmem>>, vector<32x32xf32>
    %c0_115 = arith.constant 0 : index
    %c0_116 = arith.constant 0 : index
    %236 = vector.load %arg30[%c0_115, %c0_116] : memref<1x32xf32, #tpu.memory_space<vmem>>, vector<1x32xf32>
    %c0_117 = arith.constant 0 : index
    %c0_118 = arith.constant 0 : index
    %237 = vector.load %arg31[%c0_117, %c0_118] : memref<1x32xf32, #tpu.memory_space<vmem>>, vector<1x32xf32>
    %c0_119 = arith.constant 0 : index
    %c0_120 = arith.constant 0 : index
    %238 = vector.load %arg32[%c0_119, %c0_120] : memref<1x32xf32, #tpu.memory_space<vmem>>, vector<1x32xf32>
    %cst_121 = arith.constant dense<0.000000e+00> : vector<16x32xf32>
    %239 = tpu.matmul %234, %235, %cst_121 {dimension_numbers = #tpu.dot_dimension_numbers<[1], [0], [0], [1], [0, 0, 1, 1], [], []>} : vector<16x32xf32>, vector<32x32xf32>, vector<16x32xf32> -> vector<16x32xf32>
    %240 = vector.broadcast %236 : vector<1x32xf32> to vector<16x32xf32>
    %241 = arith.addf %239, %240 : vector<16x32xf32>
    %242 = arith.mulf %241, %241 : vector<16x32xf32>
    %243 = arith.mulf %241, %242 : vector<16x32xf32>
    %cst_122 = arith.constant 4.471500e-02 : f32
    %244 = vector.broadcast %cst_122 : f32 to vector<16x32xf32>
    %245 = arith.mulf %244, %243 : vector<16x32xf32>
    %246 = arith.addf %241, %245 : vector<16x32xf32>
    %cst_123 = arith.constant 0.797884583 : f32
    %247 = vector.broadcast %cst_123 : f32 to vector<16x32xf32>
    %248 = arith.mulf %247, %246 : vector<16x32xf32>
    %249 = math.tanh %248 : vector<16x32xf32>
    %cst_124 = arith.constant 1.000000e+00 : f32
    %250 = vector.broadcast %cst_124 : f32 to vector<16x32xf32>
    %251 = arith.addf %250, %249 : vector<16x32xf32>
    %cst_125 = arith.constant 5.000000e-01 : f32
    %252 = vector.broadcast %cst_125 : f32 to vector<16x32xf32>
    %253 = arith.mulf %252, %251 : vector<16x32xf32>
    %254 = arith.mulf %241, %253 : vector<16x32xf32>
    %cst_126 = arith.constant dense<0.000000e+00> : vector<16xf32>
    %255 = vector.multi_reduction <add>, %254, %cst_126 [1] : vector<16x32xf32> to vector<16xf32>
    %256 = vector.shape_cast %255 : vector<16xf32> to vector<16x1xf32>
    %257 = arith.mulf %254, %254 : vector<16x32xf32>
    %cst_127 = arith.constant dense<0.000000e+00> : vector<16xf32>
    %258 = vector.multi_reduction <add>, %257, %cst_127 [1] : vector<16x32xf32> to vector<16xf32>
    %259 = vector.shape_cast %258 : vector<16xf32> to vector<16x1xf32>
    %cst_128 = arith.constant 3.125000e-02 : f32
    %260 = vector.broadcast %cst_128 : f32 to vector<16x1xf32>
    %261 = arith.mulf %256, %260 : vector<16x1xf32>
    %cst_129 = arith.constant 3.125000e-02 : f32
    %262 = vector.broadcast %cst_129 : f32 to vector<16x1xf32>
    %263 = arith.mulf %259, %262 : vector<16x1xf32>
    %264 = arith.mulf %261, %261 : vector<16x1xf32>
    %265 = arith.subf %263, %264 : vector<16x1xf32>
    %266 = vector.broadcast %261 : vector<16x1xf32> to vector<16x32xf32>
    %267 = arith.subf %254, %266 : vector<16x32xf32>
    %cst_130 = arith.constant 9.99999974E-6 : f32
    %268 = vector.broadcast %cst_130 : f32 to vector<16x1xf32>
    %269 = arith.addf %265, %268 : vector<16x1xf32>
    %270 = math.rsqrt %269 : vector<16x1xf32>
    %271 = vector.broadcast %270 : vector<16x1xf32> to vector<16x32xf32>
    %272 = arith.mulf %267, %271 : vector<16x32xf32>
    %273 = vector.broadcast %237 : vector<1x32xf32> to vector<16x32xf32>
    %274 = arith.mulf %272, %273 : vector<16x32xf32>
    %275 = vector.broadcast %238 : vector<1x32xf32> to vector<16x32xf32>
    %276 = arith.addf %274, %275 : vector<16x32xf32>
    %cst_131 = arith.constant dense<0.000000e+00> : vector<8x32xf32>
    %277 = tpu.matmul %4, %276, %cst_131 {dimension_numbers = #tpu.dot_dimension_numbers<[1], [0], [0], [1], [0, 0, 1, 1], [], []>} : vector<8x16xf32>, vector<16x32xf32>, vector<8x32xf32> -> vector<8x32xf32>
    %278 = arith.addf %188, %277 : vector<8x32xf32>
    %c0_132 = arith.constant 0 : index
    %c0_133 = arith.constant 0 : index
    %279 = vector.load %arg33[%c0_132, %c0_133] : memref<32x32xf32, #tpu.memory_space<vmem>>, vector<32x32xf32>
    %c0_134 = arith.constant 0 : index
    %c0_135 = arith.constant 0 : index
    %280 = vector.load %arg34[%c0_134, %c0_135] : memref<1x32xf32, #tpu.memory_space<vmem>>, vector<1x32xf32>
    %c0_136 = arith.constant 0 : index
    %c0_137 = arith.constant 0 : index
    %281 = vector.load %arg35[%c0_136, %c0_137] : memref<1x32xf32, #tpu.memory_space<vmem>>, vector<1x32xf32>
    %c0_138 = arith.constant 0 : index
    %c0_139 = arith.constant 0 : index
    %282 = vector.load %arg36[%c0_138, %c0_139] : memref<1x32xf32, #tpu.memory_space<vmem>>, vector<1x32xf32>
    %cst_140 = arith.constant dense<0.000000e+00> : vector<8x32xf32>
    %283 = tpu.matmul %278, %279, %cst_140 {dimension_numbers = #tpu.dot_dimension_numbers<[1], [0], [0], [1], [0, 0, 1, 1], [], []>} : vector<8x32xf32>, vector<32x32xf32>, vector<8x32xf32> -> vector<8x32xf32>
    %284 = vector.broadcast %280 : vector<1x32xf32> to vector<8x32xf32>
    %285 = arith.addf %283, %284 : vector<8x32xf32>
    %286 = arith.mulf %285, %285 : vector<8x32xf32>
    %287 = arith.mulf %285, %286 : vector<8x32xf32>
    %cst_141 = arith.constant 4.471500e-02 : f32
    %288 = vector.broadcast %cst_141 : f32 to vector<8x32xf32>
    %289 = arith.mulf %288, %287 : vector<8x32xf32>
    %290 = arith.addf %285, %289 : vector<8x32xf32>
    %cst_142 = arith.constant 0.797884583 : f32
    %291 = vector.broadcast %cst_142 : f32 to vector<8x32xf32>
    %292 = arith.mulf %291, %290 : vector<8x32xf32>
    %293 = math.tanh %292 : vector<8x32xf32>
    %cst_143 = arith.constant 1.000000e+00 : f32
    %294 = vector.broadcast %cst_143 : f32 to vector<8x32xf32>
    %295 = arith.addf %294, %293 : vector<8x32xf32>
    %cst_144 = arith.constant 5.000000e-01 : f32
    %296 = vector.broadcast %cst_144 : f32 to vector<8x32xf32>
    %297 = arith.mulf %296, %295 : vector<8x32xf32>
    %298 = arith.mulf %285, %297 : vector<8x32xf32>
    %cst_145 = arith.constant dense<0.000000e+00> : vector<8xf32>
    %299 = vector.multi_reduction <add>, %298, %cst_145 [1] : vector<8x32xf32> to vector<8xf32>
    %300 = vector.shape_cast %299 : vector<8xf32> to vector<8x1xf32>
    %301 = arith.mulf %298, %298 : vector<8x32xf32>
    %cst_146 = arith.constant dense<0.000000e+00> : vector<8xf32>
    %302 = vector.multi_reduction <add>, %301, %cst_146 [1] : vector<8x32xf32> to vector<8xf32>
    %303 = vector.shape_cast %302 : vector<8xf32> to vector<8x1xf32>
    %cst_147 = arith.constant 3.125000e-02 : f32
    %304 = vector.broadcast %cst_147 : f32 to vector<8x1xf32>
    %305 = arith.mulf %300, %304 : vector<8x1xf32>
    %cst_148 = arith.constant 3.125000e-02 : f32
    %306 = vector.broadcast %cst_148 : f32 to vector<8x1xf32>
    %307 = arith.mulf %303, %306 : vector<8x1xf32>
    %308 = arith.mulf %305, %305 : vector<8x1xf32>
    %309 = arith.subf %307, %308 : vector<8x1xf32>
    %310 = vector.broadcast %305 : vector<8x1xf32> to vector<8x32xf32>
    %311 = arith.subf %298, %310 : vector<8x32xf32>
    %cst_149 = arith.constant 9.99999974E-6 : f32
    %312 = vector.broadcast %cst_149 : f32 to vector<8x1xf32>
    %313 = arith.addf %309, %312 : vector<8x1xf32>
    %314 = math.rsqrt %313 : vector<8x1xf32>
    %315 = vector.broadcast %314 : vector<8x1xf32> to vector<8x32xf32>
    %316 = arith.mulf %311, %315 : vector<8x32xf32>
    %317 = vector.broadcast %281 : vector<1x32xf32> to vector<8x32xf32>
    %318 = arith.mulf %316, %317 : vector<8x32xf32>
    %319 = vector.broadcast %282 : vector<1x32xf32> to vector<8x32xf32>
    %320 = arith.addf %318, %319 : vector<8x32xf32>
    %c0_150 = arith.constant 0 : index
    %c0_151 = arith.constant 0 : index
    %321 = vector.load %arg37[%c0_150, %c0_151] : memref<32x32xf32, #tpu.memory_space<vmem>>, vector<32x32xf32>
    %c0_152 = arith.constant 0 : index
    %c0_153 = arith.constant 0 : index
    %322 = vector.load %arg38[%c0_152, %c0_153] : memref<1x32xf32, #tpu.memory_space<vmem>>, vector<1x32xf32>
    %c0_154 = arith.constant 0 : index
    %c0_155 = arith.constant 0 : index
    %323 = vector.load %arg39[%c0_154, %c0_155] : memref<1x32xf32, #tpu.memory_space<vmem>>, vector<1x32xf32>
    %c0_156 = arith.constant 0 : index
    %c0_157 = arith.constant 0 : index
    %324 = vector.load %arg40[%c0_156, %c0_157] : memref<1x32xf32, #tpu.memory_space<vmem>>, vector<1x32xf32>
    %cst_158 = arith.constant dense<0.000000e+00> : vector<8x32xf32>
    %325 = tpu.matmul %320, %321, %cst_158 {dimension_numbers = #tpu.dot_dimension_numbers<[1], [0], [0], [1], [0, 0, 1, 1], [], []>} : vector<8x32xf32>, vector<32x32xf32>, vector<8x32xf32> -> vector<8x32xf32>
    %326 = vector.broadcast %322 : vector<1x32xf32> to vector<8x32xf32>
    %327 = arith.addf %325, %326 : vector<8x32xf32>
    %328 = arith.mulf %327, %327 : vector<8x32xf32>
    %329 = arith.mulf %327, %328 : vector<8x32xf32>
    %cst_159 = arith.constant 4.471500e-02 : f32
    %330 = vector.broadcast %cst_159 : f32 to vector<8x32xf32>
    %331 = arith.mulf %330, %329 : vector<8x32xf32>
    %332 = arith.addf %327, %331 : vector<8x32xf32>
    %cst_160 = arith.constant 0.797884583 : f32
    %333 = vector.broadcast %cst_160 : f32 to vector<8x32xf32>
    %334 = arith.mulf %333, %332 : vector<8x32xf32>
    %335 = math.tanh %334 : vector<8x32xf32>
    %cst_161 = arith.constant 1.000000e+00 : f32
    %336 = vector.broadcast %cst_161 : f32 to vector<8x32xf32>
    %337 = arith.addf %336, %335 : vector<8x32xf32>
    %cst_162 = arith.constant 5.000000e-01 : f32
    %338 = vector.broadcast %cst_162 : f32 to vector<8x32xf32>
    %339 = arith.mulf %338, %337 : vector<8x32xf32>
    %340 = arith.mulf %327, %339 : vector<8x32xf32>
    %cst_163 = arith.constant dense<0.000000e+00> : vector<8xf32>
    %341 = vector.multi_reduction <add>, %340, %cst_163 [1] : vector<8x32xf32> to vector<8xf32>
    %342 = vector.shape_cast %341 : vector<8xf32> to vector<8x1xf32>
    %343 = arith.mulf %340, %340 : vector<8x32xf32>
    %cst_164 = arith.constant dense<0.000000e+00> : vector<8xf32>
    %344 = vector.multi_reduction <add>, %343, %cst_164 [1] : vector<8x32xf32> to vector<8xf32>
    %345 = vector.shape_cast %344 : vector<8xf32> to vector<8x1xf32>
    %cst_165 = arith.constant 3.125000e-02 : f32
    %346 = vector.broadcast %cst_165 : f32 to vector<8x1xf32>
    %347 = arith.mulf %342, %346 : vector<8x1xf32>
    %cst_166 = arith.constant 3.125000e-02 : f32
    %348 = vector.broadcast %cst_166 : f32 to vector<8x1xf32>
    %349 = arith.mulf %345, %348 : vector<8x1xf32>
    %350 = arith.mulf %347, %347 : vector<8x1xf32>
    %351 = arith.subf %349, %350 : vector<8x1xf32>
    %352 = vector.broadcast %347 : vector<8x1xf32> to vector<8x32xf32>
    %353 = arith.subf %340, %352 : vector<8x32xf32>
    %cst_167 = arith.constant 9.99999974E-6 : f32
    %354 = vector.broadcast %cst_167 : f32 to vector<8x1xf32>
    %355 = arith.addf %351, %354 : vector<8x1xf32>
    %356 = math.rsqrt %355 : vector<8x1xf32>
    %357 = vector.broadcast %356 : vector<8x1xf32> to vector<8x32xf32>
    %358 = arith.mulf %353, %357 : vector<8x32xf32>
    %359 = vector.broadcast %323 : vector<1x32xf32> to vector<8x32xf32>
    %360 = arith.mulf %358, %359 : vector<8x32xf32>
    %361 = vector.broadcast %324 : vector<1x32xf32> to vector<8x32xf32>
    %362 = arith.addf %360, %361 : vector<8x32xf32>
    %c0_168 = arith.constant 0 : index
    %c0_169 = arith.constant 0 : index
    %363 = vector.load %arg41[%c0_168, %c0_169] : memref<32x32xf32, #tpu.memory_space<vmem>>, vector<32x32xf32>
    %c0_170 = arith.constant 0 : index
    %c0_171 = arith.constant 0 : index
    %364 = vector.load %arg42[%c0_170, %c0_171] : memref<1x32xf32, #tpu.memory_space<vmem>>, vector<1x32xf32>
    %c0_172 = arith.constant 0 : index
    %c0_173 = arith.constant 0 : index
    %365 = vector.load %arg43[%c0_172, %c0_173] : memref<1x32xf32, #tpu.memory_space<vmem>>, vector<1x32xf32>
    %c0_174 = arith.constant 0 : index
    %c0_175 = arith.constant 0 : index
    %366 = vector.load %arg44[%c0_174, %c0_175] : memref<1x32xf32, #tpu.memory_space<vmem>>, vector<1x32xf32>
    %cst_176 = arith.constant dense<0.000000e+00> : vector<8x32xf32>
    %367 = tpu.matmul %362, %363, %cst_176 {dimension_numbers = #tpu.dot_dimension_numbers<[1], [0], [0], [1], [0, 0, 1, 1], [], []>} : vector<8x32xf32>, vector<32x32xf32>, vector<8x32xf32> -> vector<8x32xf32>
    %368 = vector.broadcast %364 : vector<1x32xf32> to vector<8x32xf32>
    %369 = arith.addf %367, %368 : vector<8x32xf32>
    %370 = arith.mulf %369, %369 : vector<8x32xf32>
    %371 = arith.mulf %369, %370 : vector<8x32xf32>
    %cst_177 = arith.constant 4.471500e-02 : f32
    %372 = vector.broadcast %cst_177 : f32 to vector<8x32xf32>
    %373 = arith.mulf %372, %371 : vector<8x32xf32>
    %374 = arith.addf %369, %373 : vector<8x32xf32>
    %cst_178 = arith.constant 0.797884583 : f32
    %375 = vector.broadcast %cst_178 : f32 to vector<8x32xf32>
    %376 = arith.mulf %375, %374 : vector<8x32xf32>
    %377 = math.tanh %376 : vector<8x32xf32>
    %cst_179 = arith.constant 1.000000e+00 : f32
    %378 = vector.broadcast %cst_179 : f32 to vector<8x32xf32>
    %379 = arith.addf %378, %377 : vector<8x32xf32>
    %cst_180 = arith.constant 5.000000e-01 : f32
    %380 = vector.broadcast %cst_180 : f32 to vector<8x32xf32>
    %381 = arith.mulf %380, %379 : vector<8x32xf32>
    %382 = arith.mulf %369, %381 : vector<8x32xf32>
    %cst_181 = arith.constant dense<0.000000e+00> : vector<8xf32>
    %383 = vector.multi_reduction <add>, %382, %cst_181 [1] : vector<8x32xf32> to vector<8xf32>
    %384 = vector.shape_cast %383 : vector<8xf32> to vector<8x1xf32>
    %385 = arith.mulf %382, %382 : vector<8x32xf32>
    %cst_182 = arith.constant dense<0.000000e+00> : vector<8xf32>
    %386 = vector.multi_reduction <add>, %385, %cst_182 [1] : vector<8x32xf32> to vector<8xf32>
    %387 = vector.shape_cast %386 : vector<8xf32> to vector<8x1xf32>
    %cst_183 = arith.constant 3.125000e-02 : f32
    %388 = vector.broadcast %cst_183 : f32 to vector<8x1xf32>
    %389 = arith.mulf %384, %388 : vector<8x1xf32>
    %cst_184 = arith.constant 3.125000e-02 : f32
    %390 = vector.broadcast %cst_184 : f32 to vector<8x1xf32>
    %391 = arith.mulf %387, %390 : vector<8x1xf32>
    %392 = arith.mulf %389, %389 : vector<8x1xf32>
    %393 = arith.subf %391, %392 : vector<8x1xf32>
    %394 = vector.broadcast %389 : vector<8x1xf32> to vector<8x32xf32>
    %395 = arith.subf %382, %394 : vector<8x32xf32>
    %cst_185 = arith.constant 9.99999974E-6 : f32
    %396 = vector.broadcast %cst_185 : f32 to vector<8x1xf32>
    %397 = arith.addf %393, %396 : vector<8x1xf32>
    %398 = math.rsqrt %397 : vector<8x1xf32>
    %399 = vector.broadcast %398 : vector<8x1xf32> to vector<8x32xf32>
    %400 = arith.mulf %395, %399 : vector<8x32xf32>
    %401 = vector.broadcast %365 : vector<1x32xf32> to vector<8x32xf32>
    %402 = arith.mulf %400, %401 : vector<8x32xf32>
    %403 = vector.broadcast %366 : vector<1x32xf32> to vector<8x32xf32>
    %404 = arith.addf %402, %403 : vector<8x32xf32>
    %c0_186 = arith.constant 0 : index
    %c0_187 = arith.constant 0 : index
    %405 = vector.load %arg45[%c0_186, %c0_187] : memref<32x8xf32, #tpu.memory_space<vmem>>, vector<32x8xf32>
    %c0_188 = arith.constant 0 : index
    %c0_189 = arith.constant 0 : index
    %406 = vector.load %arg46[%c0_188, %c0_189] : memref<1x8xf32, #tpu.memory_space<vmem>>, vector<1x8xf32>
    %cst_190 = arith.constant dense<0.000000e+00> : vector<8x8xf32>
    %407 = tpu.matmul %404, %405, %cst_190 {dimension_numbers = #tpu.dot_dimension_numbers<[1], [0], [0], [1], [0, 0, 1, 1], [], []>} : vector<8x32xf32>, vector<32x8xf32>, vector<8x8xf32> -> vector<8x8xf32>
    %408 = vector.broadcast %406 : vector<1x8xf32> to vector<8x8xf32>
    %409 = arith.addf %407, %408 : vector<8x8xf32>
    %c0_191 = arith.constant 0 : index
    %c0_192 = arith.constant 0 : index
    %410 = vector.load %arg47[%c0_191, %c0_192] : memref<8x8xf32, #tpu.memory_space<vmem>>, vector<8x8xf32>
    tpu.vector_store %arg47[%c0_191, %c0_192], %409 {strides = array<i32>} : memref<8x8xf32, #tpu.memory_space<vmem>>, vector<8x8xf32>,
    return
  }
}

</mosaic_0001>

<llo_original>
// kernel: _lambda_.1
$region0: #{_lambda_.1}
  #allocation0 [shape = 'u32[]', space=smem, size = 0x4, offset = 0x4, fixed_abs, tag = 'smem constant byte address 0x4 - core index']
  #allocation1 [shape = 'u32[72,128]{1,0:T(1,128)}', space=vmem, size = 0x9000, scoped, tag = 'internal scratch']
  %s0 = inlined_call_operand.smem [shape: u32[48], index: -1, kind: input, shape index: {}]
  %s1 = sld [smem:[%s0]]
  %s2 = scalar_lea.smem %s0, 1
  %s3 = sld [smem:[%s2]]
  %s4 = scalar_lea.smem %s0, 2
  %s5 = sld [smem:[%s4]]
  %s6 = scalar_lea.smem %s0, 3
  %s7 = sld [smem:[%s6]]
  %s8 = scalar_lea.smem %s0, 4
  %s9 = sld [smem:[%s8]]
  %s10 = scalar_lea.smem %s0, 5
  %s11 = sld [smem:[%s10]]
  %s12 = scalar_lea.smem %s0, 6
  %s13 = sld [smem:[%s12]]
  %s14 = scalar_lea.smem %s0, 7
  %s15 = sld [smem:[%s14]]
  %s16 = scalar_lea.smem %s0, 8
  %s17 = sld [smem:[%s16]]
  %s18 = scalar_lea.smem %s0, 9
  %s19 = sld [smem:[%s18]]
  %s20 = scalar_lea.smem %s0, 10
  %s21 = sld [smem:[%s20]]
  %s22 = scalar_lea.smem %s0, 11
  %s23 = sld [smem:[%s22]]
  %s24 = scalar_lea.smem %s0, 12
  %s25 = sld [smem:[%s24]]
  %s26 = scalar_lea.smem %s0, 13
  %s27 = sld [smem:[%s26]]
  %s28 = scalar_lea.smem %s0, 14
  %s29 = sld [smem:[%s28]]
  %s30 = scalar_lea.smem %s0, 15
  %s31 = sld [smem:[%s30]]
  %s32 = scalar_lea.smem %s0, 16
  %s33 = sld [smem:[%s32]]
  %s34 = scalar_lea.smem %s0, 17
  %s35 = sld [smem:[%s34]]
  %s36 = scalar_lea.smem %s0, 18
  %s37 = sld [smem:[%s36]]
  %s38 = scalar_lea.smem %s0, 19
  %s39 = sld [smem:[%s38]]
  %s40 = scalar_lea.smem %s0, 20
  %s41 = sld [smem:[%s40]]
  %s42 = scalar_lea.smem %s0, 21
  %s43 = sld [smem:[%s42]]
  %s44 = scalar_lea.smem %s0, 22
  %s45 = sld [smem:[%s44]]
  %s46 = scalar_lea.smem %s0, 23
  %s47 = sld [smem:[%s46]]
  %s48 = scalar_lea.smem %s0, 24
  %s49 = sld [smem:[%s48]]
  %s50 = scalar_lea.smem %s0, 25
  %s51 = sld [smem:[%s50]]
  %s52 = scalar_lea.smem %s0, 26
  %s53 = sld [smem:[%s52]]
  %s54 = scalar_lea.smem %s0, 27
  %s55 = sld [smem:[%s54]]
  %s56 = scalar_lea.smem %s0, 28
  %s57 = sld [smem:[%s56]]
  %s58 = scalar_lea.smem %s0, 29
  %s59 = sld [smem:[%s58]]
  %s60 = scalar_lea.smem %s0, 30
  %s61 = sld [smem:[%s60]]
  %s62 = scalar_lea.smem %s0, 31
  %s63 = sld [smem:[%s62]]
  %s64 = scalar_lea.smem %s0, 32
  %s65 = sld [smem:[%s64]]
  %s66 = scalar_lea.smem %s0, 33
  %s67 = sld [smem:[%s66]]
  %s68 = scalar_lea.smem %s0, 34
  %s69 = sld [smem:[%s68]]
  %s70 = scalar_lea.smem %s0, 35
  %s71 = sld [smem:[%s70]]
  %s72 = scalar_lea.smem %s0, 36
  %s73 = sld [smem:[%s72]]
  %s74 = scalar_lea.smem %s0, 37
  %s75 = sld [smem:[%s74]]
  %s76 = scalar_lea.smem %s0, 38
  %s77 = sld [smem:[%s76]]
  %s78 = scalar_lea.smem %s0, 39
  %s79 = sld [smem:[%s78]]
  %s80 = scalar_lea.smem %s0, 40
  %s81 = sld [smem:[%s80]]
  %s82 = scalar_lea.smem %s0, 41
  %s83 = sld [smem:[%s82]]
  %s84 = scalar_lea.smem %s0, 42
  %s85 = sld [smem:[%s84]]
  %s86 = scalar_lea.smem %s0, 43
  %s87 = sld [smem:[%s86]]
  %s88 = scalar_lea.smem %s0, 44
  %s89 = sld [smem:[%s88]]
  %s90 = scalar_lea.smem %s0, 45
  %s91 = sld [smem:[%s90]]
  %s92 = scalar_lea.smem %s0, 46
  %s93 = sld [smem:[%s92]]
  %s94 = scalar_lea.smem %s0, 47
  %s95 = sld [smem:[%s94]]
  %s96 = sld [smem:[#allocation0]]
  $region242: #{_lambda_.1} parent=0
    _
  %s98 = ssub.s32 1, %s96
  %s99 = scalar_select 0, %s98, %s96
  $region1: #{_lambda_.1} parent=0
    #allocation2 [shape = 'u8[16384]{0}', space=vmem, size = 0x4000, scoped, tag = 'input window, operand 25, single buffered']
    #allocation3 [shape = 's32[1]{0}', space=sflag, size = 0x4, scoped, tag = 'scoped memory for _lambda_.1']
    #allocation4 [shape = 'u8[16384]{0}', space=vmem, size = 0x4000, scoped, tag = 'input window, operand 29, single buffered']
    #allocation5 [shape = 's32[1]{0}', space=sflag, size = 0x4, scoped, tag = 'scoped memory for _lambda_.1']
    #allocation6 [shape = 'u8[16384]{0}', space=vmem, size = 0x4000, scoped, tag = 'input window, operand 33, single buffered']
    #allocation7 [shape = 'u8[16384]{0}', space=vmem, size = 0x4000, scoped, tag = 'input window, operand 37, single buffered']
    #allocation8 [shape = 's32[1]{0}', space=sflag, size = 0x4, scoped, tag = 'scoped memory for _lambda_.1']
    #allocation9 [shape = 'u8[512]{0}', space=vmem, size = 0x400, scoped, tag = 'input window, operand 38, single buffered']
    #allocation10 [shape = 'u8[512]{0}', space=vmem, size = 0x400, scoped, tag = 'input window, operand 39, single buffered']
    #allocation11 [shape = 's32[1]{0}', space=sflag, size = 0x4, scoped, tag = 'scoped memory for _lambda_.1']
    #allocation12 [shape = 'u8[512]{0}', space=vmem, size = 0x400, scoped, tag = 'input window, operand 40, single buffered']
    #allocation13 [shape = 'u8[16384]{0}', space=vmem, size = 0x4000, scoped, tag = 'input window, operand 41, single buffered']
    #allocation14 [shape = 's32[1]{0}', space=sflag, size = 0x4, scoped, tag = 'scoped memory for _lambda_.1']
    #allocation15 [shape = 'u8[512]{0}', space=vmem, size = 0x400, scoped, tag = 'input window, operand 42, single buffered']
    #allocation16 [shape = 'u8[512]{0}', space=vmem, size = 0x400, scoped, tag = 'input window, operand 43, single buffered']
    #allocation17 [shape = 's32[1]{0}', space=sflag, size = 0x4, scoped, tag = 'scoped memory for _lambda_.1']
    #allocation18 [shape = 'u8[512]{0}', space=vmem, size = 0x400, scoped, tag = 'input window, operand 44, single buffered']
    %100 = vsyncpa [#allocation3], 0
    %101 = vsyncpa [#allocation5], 0
    %102 = vsyncpa [#allocation8], 0
    %103 = vsyncpa [#allocation11], 0
    %104 = vsyncpa [#allocation14], 0
    %105 = vsyncpa [#allocation17], 0
    // Predicated region
    $region2: #{_lambda_.1} parent=1 // pred_check
      _
    $region3: #{_lambda_.1} parent=1 // pred_check_branch
      %107 = sbr.rel (0) target = $region5
    $region4: #{_lambda_.1} parent=1 // pred_region
      _
    $region5: #{_lambda_.1} parent=1 // pred_fallthru
      _
    // Predicated region
    $region6: #{_lambda_.1} parent=1 // pred_check
      _
    $region7: #{_lambda_.1} parent=1 // pred_check_branch
      %109 = sbr.rel (0) target = $region9
    $region8: #{_lambda_.1} parent=1 // pred_region
      _
    $region9: #{_lambda_.1} parent=1 // pred_fallthru
      _
    // Predicated region
    $region10: #{_lambda_.1} parent=1 // pred_check
      _
    $region11: #{_lambda_.1} parent=1 // pred_check_branch
      %111 = sbr.rel (0) target = $region13
    $region12: #{_lambda_.1} parent=1 // pred_region
      _
    $region13: #{_lambda_.1} parent=1 // pred_fallthru
      _
    // Predicated region
    $region14: #{_lambda_.1} parent=1 // pred_check
      _
    $region15: #{_lambda_.1} parent=1 // pred_check_branch
      %113 = sbr.rel (0) target = $region17
    $region16: #{_lambda_.1} parent=1 // pred_region
      _
    $region17: #{_lambda_.1} parent=1 // pred_fallthru
      _
    // Predicated region
    $region18: #{_lambda_.1} parent=1 // pred_check
      _
    $region19: #{_lambda_.1} parent=1 // pred_check_branch
      %115 = sbr.rel (0) target = $region21
    $region20: #{_lambda_.1} parent=1 // pred_region
      _
    $region21: #{_lambda_.1} parent=1 // pred_fallthru
      _
    // Predicated region
    $region22: #{_lambda_.1} parent=1 // pred_check
      _
    $region23: #{_lambda_.1} parent=1 // pred_check_branch
      %117 = sbr.rel (0) target = $region25
    $region24: #{_lambda_.1} parent=1 // pred_region
      _
    $region25: #{_lambda_.1} parent=1 // pred_fallthru
      _
    // Predicated region
    $region26: #{_lambda_.1} parent=1 // pred_check
      _
    $region27: #{_lambda_.1} parent=1 // pred_check_branch
      %119 = sbr.rel (0) target = $region29
    $region28: #{_lambda_.1} parent=1 // pred_region
      _
    $region29: #{_lambda_.1} parent=1 // pred_fallthru
      _
    // Predicated region
    $region30: #{_lambda_.1} parent=1 // pred_check
      _
    $region31: #{_lambda_.1} parent=1 // pred_check_branch
      %121 = sbr.rel (0) target = $region33
    $region32: #{_lambda_.1} parent=1 // pred_region
      _
    $region33: #{_lambda_.1} parent=1 // pred_fallthru
      _
    // Predicated region
    $region34: #{_lambda_.1} parent=1 // pred_check
      _
    $region35: #{_lambda_.1} parent=1 // pred_check_branch
      %123 = sbr.rel (0) target = $region37
    $region36: #{_lambda_.1} parent=1 // pred_region
      _
    $region37: #{_lambda_.1} parent=1 // pred_fallthru
      _
    // Predicated region
    $region38: #{_lambda_.1} parent=1 // pred_check
      _
    $region39: #{_lambda_.1} parent=1 // pred_check_branch
      %125 = sbr.rel (0) target = $region41
    $region40: #{_lambda_.1} parent=1 // pred_region
      _
    $region41: #{_lambda_.1} parent=1 // pred_fallthru
      _
    // Predicated region
    $region42: #{_lambda_.1} parent=1 // pred_check
      _
    $region43: #{_lambda_.1} parent=1 // pred_check_branch
      %127 = sbr.rel (0) target = $region45
    $region44: #{_lambda_.1} parent=1 // pred_region
      _
    $region45: #{_lambda_.1} parent=1 // pred_fallthru
      _
    // Predicated region
    $region46: #{_lambda_.1} parent=1 // pred_check
      _
    $region47: #{_lambda_.1} parent=1 // pred_check_branch
      %129 = sbr.rel (0) target = $region49
    $region48: #{_lambda_.1} parent=1 // pred_region
      _
    $region49: #{_lambda_.1} parent=1 // pred_fallthru
      _
    // Predicated region
    $region50: #{_lambda_.1} parent=1 // pred_check
      _
    $region51: #{_lambda_.1} parent=1 // pred_check_branch
      %131 = sbr.rel (0) target = $region53
    $region52: #{_lambda_.1} parent=1 // pred_region
      _
    $region53: #{_lambda_.1} parent=1 // pred_fallthru
      _
    // Predicated region
    $region54: #{_lambda_.1} parent=1 // pred_check
      _
    $region55: #{_lambda_.1} parent=1 // pred_check_branch
      %133 = sbr.rel (0) target = $region57
    $region56: #{_lambda_.1} parent=1 // pred_region
      _
    $region57: #{_lambda_.1} parent=1 // pred_fallthru
      _
    // Predicated region
    $region58: #{_lambda_.1} parent=1 // pred_check
      _
    $region59: #{_lambda_.1} parent=1 // pred_check_branch
      %135 = sbr.rel (0) target = $region61
    $region60: #{_lambda_.1} parent=1 // pred_region
      _
    $region61: #{_lambda_.1} parent=1 // pred_fallthru
      _
    // Predicated region
    $region62: #{_lambda_.1} parent=1 // pred_check
      _
    $region63: #{_lambda_.1} parent=1 // pred_check_branch
      %137 = sbr.rel (0) target = $region65
    $region64: #{_lambda_.1} parent=1 // pred_region
      _
    $region65: #{_lambda_.1} parent=1 // pred_fallthru
      _
    // Predicated region
    $region66: #{_lambda_.1} parent=1 // pred_check
      _
    $region67: #{_lambda_.1} parent=1 // pred_check_branch
      %139 = sbr.rel (0) target = $region69
    $region68: #{_lambda_.1} parent=1 // pred_region
      _
    $region69: #{_lambda_.1} parent=1 // pred_fallthru
      _
    // Predicated region
    $region70: #{_lambda_.1} parent=1 // pred_check
      _
    $region71: #{_lambda_.1} parent=1 // pred_check_branch
      %141 = sbr.rel (0) target = $region73
    $region72: #{_lambda_.1} parent=1 // pred_region
      _
    $region73: #{_lambda_.1} parent=1 // pred_fallthru
      _
    // Predicated region
    $region74: #{_lambda_.1} parent=1 // pred_check
      _
    $region75: #{_lambda_.1} parent=1 // pred_check_branch
      %143 = sbr.rel (0) target = $region77
    $region76: #{_lambda_.1} parent=1 // pred_region
      _
    $region77: #{_lambda_.1} parent=1 // pred_fallthru
      _
    // Predicated region
    $region78: #{_lambda_.1} parent=1 // pred_check
      _
    $region79: #{_lambda_.1} parent=1 // pred_check_branch
      %145 = sbr.rel (0) target = $region81
    $region80: #{_lambda_.1} parent=1 // pred_region
      _
    $region81: #{_lambda_.1} parent=1 // pred_fallthru
      _
    // Predicated region
    $region82: #{_lambda_.1} parent=1 // pred_check
      _
    $region83: #{_lambda_.1} parent=1 // pred_check_branch
      %147 = sbr.rel (0) target = $region85
    $region84: #{_lambda_.1} parent=1 // pred_region
      _
    $region85: #{_lambda_.1} parent=1 // pred_fallthru
      _
    // Predicated region
    $region86: #{_lambda_.1} parent=1 // pred_check
      _
    $region87: #{_lambda_.1} parent=1 // pred_check_branch
      %149 = sbr.rel (0) target = $region89
    $region88: #{_lambda_.1} parent=1 // pred_region
      _
    $region89: #{_lambda_.1} parent=1 // pred_fallthru
      _
    // Predicated region
    $region90: #{_lambda_.1} parent=1 // pred_check
      _
    $region91: #{_lambda_.1} parent=1 // pred_check_branch
      %151 = sbr.rel (0) target = $region93
    $region92: #{_lambda_.1} parent=1 // pred_region
      _
    $region93: #{_lambda_.1} parent=1 // pred_fallthru
      _
    // Predicated region
    $region94: #{_lambda_.1} parent=1 // pred_check
      _
    $region95: #{_lambda_.1} parent=1 // pred_check_branch
      %153 = sbr.rel (0) target = $region97
    $region96: #{_lambda_.1} parent=1 // pred_region
      _
    $region97: #{_lambda_.1} parent=1 // pred_fallthru
      _
    // Predicated region
    $region98: #{_lambda_.1} parent=1 // pred_check
      _
    $region99: #{_lambda_.1} parent=1 // pred_check_branch
      %155 = sbr.rel (0) target = $region101
    $region100: #{_lambda_.1} parent=1 // pred_region
      _
    $region101: #{_lambda_.1} parent=1 // pred_fallthru
      _
    // Predicated region
    $region102: #{_lambda_.1} parent=1 // pred_check
      _
    $region103: #{_lambda_.1} parent=1 // pred_check_branch
      %157 = sbr.rel (0) target = $region105
    $region104: #{_lambda_.1} parent=1 // pred_region
      %159 = vsyncadd [#allocation3], 0
      %s160 = sshll.u32 %s51, 4
      %s161 = int_to_ptr.hbm [resolvable:$true] %s160
      %s162 = sshll.u32 [#allocation2], 4
      %s163 = int_to_ptr.vmem [resolvable:$true] %s162
      %168 = dma.hbm_to_vmem [thread:$0]  %s161, 512, %s163, [#allocation3], 128, 128, 8
    $region105: #{_lambda_.1} parent=1 // pred_fallthru
      _
    // Predicated region
    $region106: #{_lambda_.1} parent=1 // pred_check
      _
    $region107: #{_lambda_.1} parent=1 // pred_check_branch
      %170 = sbr.rel (0) target = $region109
    $region108: #{_lambda_.1} parent=1 // pred_region
      _
    $region109: #{_lambda_.1} parent=1 // pred_fallthru
      _
    // Predicated region
    $region110: #{_lambda_.1} parent=1 // pred_check
      _
    $region111: #{_lambda_.1} parent=1 // pred_check_branch
      %172 = sbr.rel (0) target = $region113
    $region112: #{_lambda_.1} parent=1 // pred_region
      _
    $region113: #{_lambda_.1} parent=1 // pred_fallthru
      _
    // Predicated region
    $region114: #{_lambda_.1} parent=1 // pred_check
      _
    $region115: #{_lambda_.1} parent=1 // pred_check_branch
      %174 = sbr.rel (0) target = $region117
    $region116: #{_lambda_.1} parent=1 // pred_region
      _
    $region117: #{_lambda_.1} parent=1 // pred_fallthru
      _
    // Predicated region
    $region118: #{_lambda_.1} parent=1 // pred_check
      _
    $region119: #{_lambda_.1} parent=1 // pred_check_branch
      %176 = sbr.rel (0) target = $region121
    $region120: #{_lambda_.1} parent=1 // pred_region
      %178 = vsyncadd [#allocation5], 0
      %s179 = sshll.u32 %s59, 4
      %s180 = int_to_ptr.hbm [resolvable:$true] %s179
      %s181 = sshll.u32 [#allocation4], 4
      %s182 = int_to_ptr.vmem [resolvable:$true] %s181
      %187 = dma.hbm_to_vmem [thread:$0]  %s180, 512, %s182, [#allocation5], 128, 128, 8
    $region121: #{_lambda_.1} parent=1 // pred_fallthru
      _
    // Predicated region
    $region122: #{_lambda_.1} parent=1 // pred_check
      _
    $region123: #{_lambda_.1} parent=1 // pred_check_branch
      %189 = sbr.rel (0) target = $region125
    $region124: #{_lambda_.1} parent=1 // pred_region
      _
    $region125: #{_lambda_.1} parent=1 // pred_fallthru
      _
    // Predicated region
    $region126: #{_lambda_.1} parent=1 // pred_check
      _
    $region127: #{_lambda_.1} parent=1 // pred_check_branch
      %191 = sbr.rel (0) target = $region129
    $region128: #{_lambda_.1} parent=1 // pred_region
      _
    $region129: #{_lambda_.1} parent=1 // pred_fallthru
      _
    // Predicated region
    $region130: #{_lambda_.1} parent=1 // pred_check
      _
    $region131: #{_lambda_.1} parent=1 // pred_check_branch
      %193 = sbr.rel (0) target = $region133
    $region132: #{_lambda_.1} parent=1 // pred_region
      _
    $region133: #{_lambda_.1} parent=1 // pred_fallthru
      _
    // Predicated region
    $region134: #{_lambda_.1} parent=1 // pred_check
      _
    $region135: #{_lambda_.1} parent=1 // pred_check_branch
      %195 = sbr.rel (0) target = $region137
    $region136: #{_lambda_.1} parent=1 // pred_region
      %197 = vsyncadd [#allocation5], 0
      %s198 = sshll.u32 %s67, 4
      %s199 = int_to_ptr.hbm [resolvable:$true] %s198
      %s200 = sshll.u32 [#allocation6], 4
      %s201 = int_to_ptr.vmem [resolvable:$true] %s200
      %206 = dma.hbm_to_vmem [thread:$0]  %s199, 512, %s201, [#allocation5], 128, 128, 8
    $region137: #{_lambda_.1} parent=1 // pred_fallthru
      _
    // Predicated region
    $region138: #{_lambda_.1} parent=1 // pred_check
      _
    $region139: #{_lambda_.1} parent=1 // pred_check_branch
      %208 = sbr.rel (0) target = $region141
    $region140: #{_lambda_.1} parent=1 // pred_region
      _
    $region141: #{_lambda_.1} parent=1 // pred_fallthru
      _
    // Predicated region
    $region142: #{_lambda_.1} parent=1 // pred_check
      _
    $region143: #{_lambda_.1} parent=1 // pred_check_branch
      %210 = sbr.rel (0) target = $region145
    $region144: #{_lambda_.1} parent=1 // pred_region
      _
    $region145: #{_lambda_.1} parent=1 // pred_fallthru
      _
    // Predicated region
    $region146: #{_lambda_.1} parent=1 // pred_check
      _
    $region147: #{_lambda_.1} parent=1 // pred_check_branch
      %212 = sbr.rel (0) target = $region149
    $region148: #{_lambda_.1} parent=1 // pred_region
      _
    $region149: #{_lambda_.1} parent=1 // pred_fallthru
      _
    // Predicated region
    $region150: #{_lambda_.1} parent=1 // pred_check
      _
    $region151: #{_lambda_.1} parent=1 // pred_check_branch
      %214 = sbr.rel (0) target = $region153
    $region152: #{_lambda_.1} parent=1 // pred_region
      %216 = vsyncadd [#allocation8], 0
      %s217 = sshll.u32 %s75, 4
      %s218 = int_to_ptr.hbm [resolvable:$true] %s217
      %s219 = sshll.u32 [#allocation7], 4
      %s220 = int_to_ptr.vmem [resolvable:$true] %s219
      %225 = dma.hbm_to_vmem [thread:$0]  %s218, 512, %s220, [#allocation8], 128, 128, 8
    $region153: #{_lambda_.1} parent=1 // pred_fallthru
      _
    // Predicated region
    $region154: #{_lambda_.1} parent=1 // pred_check
      _
    $region155: #{_lambda_.1} parent=1 // pred_check_branch
      %227 = sbr.rel (0) target = $region157
    $region156: #{_lambda_.1} parent=1 // pred_region
      %229 = vsyncadd [#allocation8], 0
      %s231 = sshll.u32 %s77, 4
      %s232 = int_to_ptr.hbm [resolvable:$true] %s231
      %s233 = sshll.u32 [#allocation9], 4
      %s234 = int_to_ptr.vmem [resolvable:$true] %s233
      %236 = dma.hbm_to_vmem [thread:$0]  %s232, 16, %s234, [#allocation8]
    $region157: #{_lambda_.1} parent=1 // pred_fallthru
      _
    // Predicated region
    $region158: #{_lambda_.1} parent=1 // pred_check
      _
    $region159: #{_lambda_.1} parent=1 // pred_check_branch
      %238 = sbr.rel (0) target = $region161
    $region160: #{_lambda_.1} parent=1 // pred_region
      %240 = vsyncadd [#allocation11], 0
      %s242 = sshll.u32 %s79, 4
      %s243 = int_to_ptr.hbm [resolvable:$true] %s242
      %s244 = sshll.u32 [#allocation10], 4
      %s245 = int_to_ptr.vmem [resolvable:$true] %s244
      %247 = dma.hbm_to_vmem [thread:$0]  %s243, 16, %s245, [#allocation11]
    $region161: #{_lambda_.1} parent=1 // pred_fallthru
      _
    // Predicated region
    $region162: #{_lambda_.1} parent=1 // pred_check
      _
    $region163: #{_lambda_.1} parent=1 // pred_check_branch
      %249 = sbr.rel (0) target = $region165
    $region164: #{_lambda_.1} parent=1 // pred_region
      %251 = vsyncadd [#allocation11], 0
      %s253 = sshll.u32 %s81, 4
      %s254 = int_to_ptr.hbm [resolvable:$true] %s253
      %s255 = sshll.u32 [#allocation12], 4
      %s256 = int_to_ptr.vmem [resolvable:$true] %s255
      %258 = dma.hbm_to_vmem [thread:$0]  %s254, 16, %s256, [#allocation11]
    $region165: #{_lambda_.1} parent=1 // pred_fallthru
      _
    // Predicated region
    $region166: #{_lambda_.1} parent=1 // pred_check
      _
    $region167: #{_lambda_.1} parent=1 // pred_check_branch
      %260 = sbr.rel (0) target = $region169
    $region168: #{_lambda_.1} parent=1 // pred_region
      %262 = vsyncadd [#allocation14], 0
      %s263 = sshll.u32 %s83, 4
      %s264 = int_to_ptr.hbm [resolvable:$true] %s263
      %s265 = sshll.u32 [#allocation13], 4
      %s266 = int_to_ptr.vmem [resolvable:$true] %s265
      %271 = dma.hbm_to_vmem [thread:$0]  %s264, 512, %s266, [#allocation14], 128, 128, 8
    $region169: #{_lambda_.1} parent=1 // pred_fallthru
      _
    // Predicated region
    $region170: #{_lambda_.1} parent=1 // pred_check
      _
    $region171: #{_lambda_.1} parent=1 // pred_check_branch
      %273 = sbr.rel (0) target = $region173
    $region172: #{_lambda_.1} parent=1 // pred_region
      %275 = vsyncadd [#allocation14], 0
      %s277 = sshll.u32 %s85, 4
      %s278 = int_to_ptr.hbm [resolvable:$true] %s277
      %s279 = sshll.u32 [#allocation15], 4
      %s280 = int_to_ptr.vmem [resolvable:$true] %s279
      %282 = dma.hbm_to_vmem [thread:$0]  %s278, 16, %s280, [#allocation14]
    $region173: #{_lambda_.1} parent=1 // pred_fallthru
      _
    // Predicated region
    $region174: #{_lambda_.1} parent=1 // pred_check
      _
    $region175: #{_lambda_.1} parent=1 // pred_check_branch
      %284 = sbr.rel (0) target = $region177
    $region176: #{_lambda_.1} parent=1 // pred_region
      %286 = vsyncadd [#allocation17], 0
      %s288 = sshll.u32 %s87, 4
      %s289 = int_to_ptr.hbm [resolvable:$true] %s288
      %s290 = sshll.u32 [#allocation16], 4
      %s291 = int_to_ptr.vmem [resolvable:$true] %s290
      %293 = dma.hbm_to_vmem [thread:$0]  %s289, 16, %s291, [#allocation17]
    $region177: #{_lambda_.1} parent=1 // pred_fallthru
      _
    // Predicated region
    $region178: #{_lambda_.1} parent=1 // pred_check
      _
    $region179: #{_lambda_.1} parent=1 // pred_check_branch
      %295 = sbr.rel (0) target = $region181
    $region180: #{_lambda_.1} parent=1 // pred_region
      %297 = vsyncadd [#allocation17], 0
      %s299 = sshll.u32 %s89, 4
      %s300 = int_to_ptr.hbm [resolvable:$true] %s299
      %s301 = sshll.u32 [#allocation18], 4
      %s302 = int_to_ptr.vmem [resolvable:$true] %s301
      %304 = dma.hbm_to_vmem [thread:$0]  %s300, 16, %s302, [#allocation17]
    $region181: #{_lambda_.1} parent=1 // pred_fallthru
      _
    // Predicated region
    $region182: #{_lambda_.1} parent=1 // pred_check
      _
    $region183: #{_lambda_.1} parent=1 // pred_check_branch
      %306 = sbr.rel (0) target = $region185
    $region184: #{_lambda_.1} parent=1 // pred_region
      _
    $region185: #{_lambda_.1} parent=1 // pred_fallthru
      _
    // Predicated region
    $region186: #{_lambda_.1} parent=1 // pred_check
      _
    $region187: #{_lambda_.1} parent=1 // pred_check_branch
      %308 = sbr.rel (0) target = $region189
    $region188: #{_lambda_.1} parent=1 // pred_region
      _
    $region189: #{_lambda_.1} parent=1 // pred_fallthru
      _
    // Predicated region
    $region190: #{_lambda_.1} parent=1 // pred_check
      _
    $region191: #{_lambda_.1} parent=1 // pred_check_branch
      %310 = sbr.rel (0) target = $region193
    $region192: #{_lambda_.1} parent=1 // pred_region
      %312 = dma.done [#allocation3], 512
    $region193: #{_lambda_.1} parent=1 // pred_fallthru
      _
    // Predicated region
    $region194: #{_lambda_.1} parent=1 // pred_check
      _
    $region195: #{_lambda_.1} parent=1 // pred_check_branch
      %314 = sbr.rel (0) target = $region197
    $region196: #{_lambda_.1} parent=1 // pred_region
      %316 = dma.done [#allocation5], 512
    $region197: #{_lambda_.1} parent=1 // pred_fallthru
      _
    // Predicated region
    $region198: #{_lambda_.1} parent=1 // pred_check
      _
    $region199: #{_lambda_.1} parent=1 // pred_check_branch
      %318 = sbr.rel (0) target = $region201
    $region200: #{_lambda_.1} parent=1 // pred_region
      %320 = dma.done [#allocation5], 512
    $region201: #{_lambda_.1} parent=1 // pred_fallthru
      _
    // Predicated region
    $region202: #{_lambda_.1} parent=1 // pred_check
      _
    $region203: #{_lambda_.1} parent=1 // pred_check_branch
      %322 = sbr.rel (0) target = $region205
    $region204: #{_lambda_.1} parent=1 // pred_region
      %324 = dma.done [#allocation8], 512
    $region205: #{_lambda_.1} parent=1 // pred_fallthru
      _
    // Predicated region
    $region206: #{_lambda_.1} parent=1 // pred_check
      _
    $region207: #{_lambda_.1} parent=1 // pred_check_branch
      %326 = sbr.rel (0) target = $region209
    $region208: #{_lambda_.1} parent=1 // pred_region
      %328 = dma.done [#allocation8], 16
    $region209: #{_lambda_.1} parent=1 // pred_fallthru
      _
    // Predicated region
    $region210: #{_lambda_.1} parent=1 // pred_check
      _
    $region211: #{_lambda_.1} parent=1 // pred_check_branch
      %330 = sbr.rel (0) target = $region213
    $region212: #{_lambda_.1} parent=1 // pred_region
      %332 = dma.done [#allocation11], 16
    $region213: #{_lambda_.1} parent=1 // pred_fallthru
      _
    // Predicated region
    $region214: #{_lambda_.1} parent=1 // pred_check
      _
    $region215: #{_lambda_.1} parent=1 // pred_check_branch
      %334 = sbr.rel (0) target = $region217
    $region216: #{_lambda_.1} parent=1 // pred_region
      %336 = dma.done [#allocation11], 16
    $region217: #{_lambda_.1} parent=1 // pred_fallthru
      _
    // Predicated region
    $region218: #{_lambda_.1} parent=1 // pred_check
      _
    $region219: #{_lambda_.1} parent=1 // pred_check_branch
      %338 = sbr.rel (0) target = $region221
    $region220: #{_lambda_.1} parent=1 // pred_region
      %340 = dma.done [#allocation14], 512
    $region221: #{_lambda_.1} parent=1 // pred_fallthru
      _
    // Predicated region
    $region222: #{_lambda_.1} parent=1 // pred_check
      _
    $region223: #{_lambda_.1} parent=1 // pred_check_branch
      %342 = sbr.rel (0) target = $region225
    $region224: #{_lambda_.1} parent=1 // pred_region
      %344 = dma.done [#allocation14], 16
    $region225: #{_lambda_.1} parent=1 // pred_fallthru
      _
    // Predicated region
    $region226: #{_lambda_.1} parent=1 // pred_check
      _
    $region227: #{_lambda_.1} parent=1 // pred_check_branch
      %346 = sbr.rel (0) target = $region229
    $region228: #{_lambda_.1} parent=1 // pred_region
      %348 = dma.done [#allocation17], 16
    $region229: #{_lambda_.1} parent=1 // pred_fallthru
      _
    // Predicated region
    $region230: #{_lambda_.1} parent=1 // pred_check
      _
    $region231: #{_lambda_.1} parent=1 // pred_check_branch
      %350 = sbr.rel (0) target = $region233
    $region232: #{_lambda_.1} parent=1 // pred_region
      %352 = dma.done [#allocation17], 16
    $region233: #{_lambda_.1} parent=1 // pred_fallthru
      _
    %v353 = vld [vmem:[%s1] sm:$0xff]
    %v354 = vld [vmem:[%s3] sm:$0xff]
    %v355 = vld [vmem:[%s3 + $0x8] sm:$0xff]
    %v356 = vld [vmem:[%s5] sm:$0xff]
    %v357 = vld [vmem:[%s5 + $0x8] sm:$0xff]
    %v358 = vld [vmem:[%s7] sm:$0xff]
    %v359 = vld [vmem:[%s7 + $0x8] sm:$0xff]
    %v360 = vld [vmem:[%s9] sm:$0xff]
    %v361 = vld [vmem:[%s11] sm:$0xff]
    %v362 = vld [vmem:[%s11 + $0x8] sm:$0xff]
    %v363 = vld [vmem:[%s13] sm:$0x1]
    %v365 = vperm.slane %v363, 0
    %vm367 = vcmask 130048
    %v369 = vsel %vm367, %v353, 0
    %371 = vmatpush.msra.mxu0 0.0
    %372 = vmatpush.msra.mxu0 0.0
    %373 = vmatpush.msra.mxu0 0.0
    %374 = vmatpush.msra.mxu0 0.0
    %375 = vmatpush.msra.mxu0 0.0
    %376 = vmatpush.msra.mxu0 0.0
    %377 = vmatpush.msra.mxu0 0.0
    %378 = vmatpush.msra.mxu0 0.0
    %379 = vmatpush.msra.mxu0 0.0
    %380 = vmatpush.msra.mxu0 0.0
    %381 = vmatpush.msra.mxu0 0.0
    %382 = vmatpush.msra.mxu0 0.0
    %383 = vmatpush.msra.mxu0 0.0
    %384 = vmatpush.msra.mxu0 0.0
    %385 = vmatpush.msra.mxu0 %v362
    %386 = vmatpush.msra.mxu0 %v361
    %387 = vmatmul.f32.gmra.mxu0 %v369
    %v388 = vpop.f32.mrf.mxu0
    %v389 = vadd.f32 %v365, %v388
    %390 = vdwg.mxu0
    %v391 = vld [vmem:[%s15] sm:$0x3]
    %v392 = vld [vmem:[%s17] sm:$0x1]
    %v394 = vperm.slane %v392, 0
    %vm396 = vcmask 15360
    %v398 = vsel %vm396, %v354, 0
    %v401 = vsel %vm396, %v355, 0
    %vm403 = vcmask 1041408
    %v405 = vsel %vm403, %v391, 0
    %407 = vmatpush.msra.mxu0 0.0
    %408 = vmatpush.msra.mxu0 0.0
    %409 = vmatpush.msra.mxu0 0.0
    %410 = vmatpush.msra.mxu0 0.0
    %411 = vmatpush.msra.mxu0 0.0
    %412 = vmatpush.msra.mxu0 0.0
    %413 = vmatpush.msra.mxu0 0.0
    %414 = vmatpush.msra.mxu0 0.0
    %415 = vmatpush.msra.mxu0 0.0
    %416 = vmatpush.msra.mxu0 0.0
    %417 = vmatpush.msra.mxu0 0.0
    %418 = vmatpush.msra.mxu0 0.0
    %419 = vmatpush.msra.mxu0 0.0
    %420 = vmatpush.msra.mxu0 0.0
    %421 = vmatpush.msra.mxu0 0.0
    %422 = vmatpush.msra.mxu0 %v405
    %423 = vmatmul.f32.gmra.mxu0 %v398
    %v424 = vpop.f32.mrf.mxu0
    %v425 = vadd.f32 %v394, %v424
    %426 = vmatmul.f32.gmra.mxu0 %v401
    %v427 = vpop.f32.mrf.mxu0
    %v428 = vadd.f32 %v394, %v427
    %429 = vdwg.mxu0
    %vm430 = vcmask 64512
    %v432 = vsel %vm430, %v356, 0
    %v435 = vsel %vm430, %v357, 0
    %437 = vmatpush.msra.mxu0 0.0
    %438 = vmatpush.msra.mxu0 0.0
    %439 = vmatpush.msra.mxu0 0.0
    %440 = vmatpush.msra.mxu0 0.0
    %441 = vmatpush.msra.mxu0 0.0
    %442 = vmatpush.msra.mxu0 0.0
    %443 = vmatpush.msra.mxu0 0.0
    %444 = vmatpush.msra.mxu0 0.0
    %445 = vmatpush.msra.mxu0 0.0
    %446 = vmatpush.msra.mxu0 0.0
    %447 = vmatpush.msra.mxu0 0.0
    %448 = vmatpush.msra.mxu0 0.0
    %449 = vmatpush.msra.mxu0 0.0
    %450 = vmatpush.msra.mxu0 0.0
    %451 = vmatpush.msra.mxu0 0.0
    %452 = vmatpush.msra.mxu0 %v389
    %453 = vmatmul.f32.gmra.mxu0 %v432
    %v454 = vpop.f32.mrf.mxu0
    %v455 = vadd.f32 0.0, %v454
    %456 = vmatmul.f32.gmra.mxu0 %v435
    %v457 = vpop.f32.mrf.mxu0
    %v458 = vadd.f32 0.0, %v457
    %459 = vdwg.mxu0
    %v461 = vsel %vm430, %v358, 0
    %v464 = vsel %vm430, %v359, 0
    %466 = vmatpush.msra.mxu0 0.0
    %467 = vmatpush.msra.mxu0 0.0
    %468 = vmatpush.msra.mxu0 0.0
    %469 = vmatpush.msra.mxu0 0.0
    %470 = vmatpush.msra.mxu0 0.0
    %471 = vmatpush.msra.mxu0 0.0
    %472 = vmatpush.msra.mxu0 0.0
    %473 = vmatpush.msra.mxu0 0.0
    %474 = vmatpush.msra.mxu0 0.0
    %475 = vmatpush.msra.mxu0 0.0
    %476 = vmatpush.msra.mxu0 0.0
    %477 = vmatpush.msra.mxu0 0.0
    %478 = vmatpush.msra.mxu0 0.0
    %479 = vmatpush.msra.mxu0 0.0
    %480 = vmatpush.msra.mxu0 0.0
    %481 = vmatpush.msra.mxu0 %v389
    %482 = vmatmul.f32.gmra.mxu0 %v461
    %v483 = vpop.f32.mrf.mxu0
    %v484 = vadd.f32 0.0, %v483
    %485 = vmatmul.f32.gmra.mxu0 %v464
    %v486 = vpop.f32.mrf.mxu0
    %v487 = vadd.f32 0.0, %v486
    %488 = vdwg.mxu0
    %v489 = vadd.f32 %v425, %v455
    %v490 = vadd.f32 %v428, %v458
    %v491 = vadd.f32 %v489, %v484
    %v492 = vadd.f32 %v490, %v487
    %v493 = vld [vmem:[%s19] sm:$0xff]
    %v494 = vld [vmem:[%s19 + $0x8] sm:$0xff]
    %v495 = vld [vmem:[%s19 + $0x10] sm:$0xff]
    %v496 = vld [vmem:[%s19 + $0x18] sm:$0xff]
    %v497 = vld [vmem:[%s21] sm:$0x1]
    %v498 = vld [vmem:[%s23] sm:$0x1]
    %v499 = vld [vmem:[%s25] sm:$0x1]
    %v501 = vperm.slane %v497, 0
    %vm503 = vcmask 261120
    %v505 = vsel %vm503, %v491, 0
    %v508 = vsel %vm503, %v492, 0
    %510 = vmatpush.msra.mxu0 0.0
    %511 = vmatpush.msra.mxu0 0.0
    %512 = vmatpush.msra.mxu0 0.0
    %513 = vmatpush.msra.mxu0 0.0
    %514 = vmatpush.msra.mxu0 0.0
    %515 = vmatpush.msra.mxu0 0.0
    %516 = vmatpush.msra.mxu0 0.0
    %517 = vmatpush.msra.mxu0 0.0
    %518 = vmatpush.msra.mxu0 0.0
    %519 = vmatpush.msra.mxu0 0.0
    %520 = vmatpush.msra.mxu0 0.0
    %521 = vmatpush.msra.mxu0 0.0
    %522 = vmatpush.msra.mxu0 %v496
    %523 = vmatpush.msra.mxu0 %v495
    %524 = vmatpush.msra.mxu0 %v494
    %525 = vmatpush.msra.mxu0 %v493
    %526 = vmatmul.f32.gmra.mxu0 %v505
    %v527 = vpop.f32.mrf.mxu0
    %v528 = vadd.f32 %v501, %v527
    %529 = vmatmul.f32.gmra.mxu0 %v508
    %v530 = vpop.f32.mrf.mxu0
    %v531 = vadd.f32 %v501, %v530
    %532 = vdwg.mxu0
    %v533 = vmul.f32 %v528, %v528
    %v534 = vmul.f32 %v531, %v531
    %v535 = vmul.f32 %v528, %v533
    %v536 = vmul.f32 %v531, %v534
    %v537 = vmul.f32 %v535, 0.044715
    %v538 = vmul.f32 %v536, 0.044715
    %v539 = vadd.f32 %v528, %v537
    %v540 = vadd.f32 %v531, %v538
    %v541 = vmul.f32 %v539, 0.7978846
    %v542 = vmul.f32 %v540, 0.7978846
    %v543 = vtanh.pop %v541
    %v544 = vtanh.pop %v542
    %v545 = vadd.f32 %v543, 1.0
    %v546 = vadd.f32 %v544, 1.0
    %v547 = vmul.f32 %v545, 0.5
    %v548 = vmul.f32 %v546, 0.5
    %v549 = vmul.f32 %v528, %v547
    %v550 = vmul.f32 %v531, %v548
    %v551 = vsel %vm503, %v549, 0.0
    %552 = vadd.xlane.f32.xlu0 %v551
    %v553 = vpop.xlane.xlu0 %552
    %v554 = vsel %vm503, %v550, 0.0
    %555 = vadd.xlane.f32.xlu0 %v554
    %v556 = vpop.xlane.xlu0 %555
    %v557 = vmul.f32 %v549, %v549
    %v558 = vmul.f32 %v550, %v550
    %v559 = vsel %vm503, %v557, 0.0
    %560 = vadd.xlane.f32.xlu0 %v559
    %v561 = vpop.xlane.xlu0 %560
    %v562 = vsel %vm503, %v558, 0.0
    %563 = vadd.xlane.f32.xlu0 %v562
    %v564 = vpop.xlane.xlu0 %563
    %v565 = vmul.f32 %v553, 0.03125
    %v566 = vmul.f32 %v556, 0.03125
    %v567 = vmul.f32 %v561, 0.03125
    %v568 = vmul.f32 %v564, 0.03125
    %v569 = vmul.f32 %v565, %v565
    %v570 = vmul.f32 %v566, %v566
    %v571 = vsub.f32 %v567, %v569
    %v572 = vsub.f32 %v568, %v570
    %v573 = vsub.f32 %v549, %v565
    %v574 = vsub.f32 %v550, %v566
    %v575 = vadd.f32 %v571, 1e-05
    %v576 = vadd.f32 %v572, 1e-05
    %v577 = vrsqrt.pop %v575
    %v578 = vmul.f32 %v577, %v575
    %v579 = vmul.f32 %v578, %v577
    %v580 = vmul.f32 0.5, %v579
    %v581 = vsub.f32 1.5, %v580
    %v582 = vmul.f32 %v577, %v581
    %vm583 = vweird.f32 %v575
    %vm584 = vweird.f32 %v577
    %vm585 = vmor %vm583, %vm584
    %v586 = vsel %vm585, %v577, %v582
    %v587 = vrsqrt.pop %v576
    %v588 = vmul.f32 %v587, %v576
    %v589 = vmul.f32 %v588, %v587
    %v590 = vmul.f32 0.5, %v589
    %v591 = vsub.f32 1.5, %v590
    %v592 = vmul.f32 %v587, %v591
    %vm593 = vweird.f32 %v576
    %vm594 = vweird.f32 %v587
    %vm595 = vmor %vm593, %vm594
    %v596 = vsel %vm595, %v587, %v592
    %v597 = vmul.f32 %v573, %v586
    %v598 = vmul.f32 %v574, %v596
    %v600 = vperm.slane %v498, 0
    %v602 = vmul.f32 %v597, %v600
    %v603 = vmul.f32 %v598, %v600
    %v605 = vperm.slane %v499, 0
    %v607 = vadd.f32 %v602, %v605
    %v608 = vadd.f32 %v603, %v605
    %v609 = vld [vmem:[%s27] sm:$0xff]
    %v610 = vld [vmem:[%s27 + $0x8] sm:$0xff]
    %v611 = vld [vmem:[%s27 + $0x10] sm:$0xff]
    %v612 = vld [vmem:[%s27 + $0x18] sm:$0xff]
    %v613 = vld [vmem:[%s29] sm:$0x1]
    %v614 = vld [vmem:[%s31] sm:$0x1]
    %v615 = vld [vmem:[%s33] sm:$0x1]
    %v617 = vperm.slane %v613, 0
    %v620 = vsel %vm503, %v607, 0
    %v623 = vsel %vm503, %v608, 0
    %625 = vmatpush.msra.mxu0 0.0
    %626 = vmatpush.msra.mxu0 0.0
    %627 = vmatpush.msra.mxu0 0.0
    %628 = vmatpush.msra.mxu0 0.0
    %629 = vmatpush.msra.mxu0 0.0
    %630 = vmatpush.msra.mxu0 0.0
    %631 = vmatpush.msra.mxu0 0.0
    %632 = vmatpush.msra.mxu0 0.0
    %633 = vmatpush.msra.mxu0 0.0
    %634 = vmatpush.msra.mxu0 0.0
    %635 = vmatpush.msra.mxu0 0.0
    %636 = vmatpush.msra.mxu0 0.0
    %637 = vmatpush.msra.mxu0 %v612
    %638 = vmatpush.msra.mxu0 %v611
    %639 = vmatpush.msra.mxu0 %v610
    %640 = vmatpush.msra.mxu0 %v609
    %641 = vmatmul.f32.gmra.mxu0 %v620
    %v642 = vpop.f32.mrf.mxu0
    %v643 = vadd.f32 %v617, %v642
    %644 = vmatmul.f32.gmra.mxu0 %v623
    %v645 = vpop.f32.mrf.mxu0
    %v646 = vadd.f32 %v617, %v645
    %647 = vdwg.mxu0
    %v648 = vmul.f32 %v643, %v643
    %v649 = vmul.f32 %v646, %v646
    %v650 = vmul.f32 %v643, %v648
    %v651 = vmul.f32 %v646, %v649
    %v652 = vmul.f32 %v650, 0.044715
    %v653 = vmul.f32 %v651, 0.044715
    %v654 = vadd.f32 %v643, %v652
    %v655 = vadd.f32 %v646, %v653
    %v656 = vmul.f32 %v654, 0.7978846
    %v657 = vmul.f32 %v655, 0.7978846
    %v658 = vtanh.pop %v656
    %v659 = vtanh.pop %v657
    %v660 = vadd.f32 %v658, 1.0
    %v661 = vadd.f32 %v659, 1.0
    %v662 = vmul.f32 %v660, 0.5
    %v663 = vmul.f32 %v661, 0.5
    %v664 = vmul.f32 %v643, %v662
    %v665 = vmul.f32 %v646, %v663
    %v666 = vsel %vm503, %v664, 0.0
    %667 = vadd.xlane.f32.xlu0 %v666
    %v668 = vpop.xlane.xlu0 %667
    %v669 = vsel %vm503, %v665, 0.0
    %670 = vadd.xlane.f32.xlu0 %v669
    %v671 = vpop.xlane.xlu0 %670
    %v672 = vmul.f32 %v664, %v664
    %v673 = vmul.f32 %v665, %v665
    %v674 = vsel %vm503, %v672, 0.0
    %675 = vadd.xlane.f32.xlu0 %v674
    %v676 = vpop.xlane.xlu0 %675
    %v677 = vsel %vm503, %v673, 0.0
    %678 = vadd.xlane.f32.xlu0 %v677
    %v679 = vpop.xlane.xlu0 %678
    %v680 = vmul.f32 %v668, 0.03125
    %v681 = vmul.f32 %v671, 0.03125
    %v682 = vmul.f32 %v676, 0.03125
    %v683 = vmul.f32 %v679, 0.03125
    %v684 = vmul.f32 %v680, %v680
    %v685 = vmul.f32 %v681, %v681
    %v686 = vsub.f32 %v682, %v684
    %v687 = vsub.f32 %v683, %v685
    %v688 = vsub.f32 %v664, %v680
    %v689 = vsub.f32 %v665, %v681
    %v690 = vadd.f32 %v686, 1e-05
    %v691 = vadd.f32 %v687, 1e-05
    %v692 = vrsqrt.pop %v690
    %v693 = vmul.f32 %v692, %v690
    %v694 = vmul.f32 %v693, %v692
    %v695 = vmul.f32 0.5, %v694
    %v696 = vsub.f32 1.5, %v695
    %v697 = vmul.f32 %v692, %v696
    %vm698 = vweird.f32 %v690
    %vm699 = vweird.f32 %v692
    %vm700 = vmor %vm698, %vm699
    %v701 = vsel %vm700, %v692, %v697
    %v702 = vrsqrt.pop %v691
    %v703 = vmul.f32 %v702, %v691
    %v704 = vmul.f32 %v703, %v702
    %v705 = vmul.f32 0.5, %v704
    %v706 = vsub.f32 1.5, %v705
    %v707 = vmul.f32 %v702, %v706
    %vm708 = vweird.f32 %v691
    %vm709 = vweird.f32 %v702
    %vm710 = vmor %vm708, %vm709
    %v711 = vsel %vm710, %v702, %v707
    %v712 = vmul.f32 %v688, %v701
    %v713 = vmul.f32 %v689, %v711
    %v715 = vperm.slane %v614, 0
    %v717 = vmul.f32 %v712, %v715
    %v718 = vmul.f32 %v713, %v715
    %v720 = vperm.slane %v615, 0
    %v722 = vadd.f32 %v717, %v720
    %v723 = vadd.f32 %v718, %v720
    %v725 = vsel %vm367, %v360, 0
    %727 = vmatpush.msra.mxu0 0.0
    %728 = vmatpush.msra.mxu0 0.0
    %729 = vmatpush.msra.mxu0 0.0
    %730 = vmatpush.msra.mxu0 0.0
    %731 = vmatpush.msra.mxu0 0.0
    %732 = vmatpush.msra.mxu0 0.0
    %733 = vmatpush.msra.mxu0 0.0
    %734 = vmatpush.msra.mxu0 0.0
    %735 = vmatpush.msra.mxu0 0.0
    %736 = vmatpush.msra.mxu0 0.0
    %737 = vmatpush.msra.mxu0 0.0
    %738 = vmatpush.msra.mxu0 0.0
    %739 = vmatpush.msra.mxu0 0.0
    %740 = vmatpush.msra.mxu0 0.0
    %741 = vmatpush.msra.mxu0 %v723
    %742 = vmatpush.msra.mxu0 %v722
    %743 = vmatmul.f32.gmra.mxu0 %v725
    %v744 = vpop.f32.mrf.mxu0
    %v745 = vadd.f32 0.0, %v744
    %746 = vdwg.mxu0
    %v747 = vadd.f32 %v389, %v745
    %v748 = vld [vmem:[%s35] sm:$0xff]
    %v749 = vld [vmem:[%s35 + $0x8] sm:$0xff]
    %v750 = vld [vmem:[%s35 + $0x10] sm:$0xff]
    %v751 = vld [vmem:[%s35 + $0x18] sm:$0xff]
    %v752 = vld [vmem:[%s37] sm:$0x1]
    %v753 = vld [vmem:[%s39] sm:$0x1]
    %v754 = vld [vmem:[%s41] sm:$0x1]
    %v756 = vperm.slane %v752, 0
    %v759 = vsel %vm503, %v747, 0
    %761 = vmatpush.msra.mxu0 0.0
    %762 = vmatpush.msra.mxu0 0.0
    %763 = vmatpush.msra.mxu0 0.0
    %764 = vmatpush.msra.mxu0 0.0
    %765 = vmatpush.msra.mxu0 0.0
    %766 = vmatpush.msra.mxu0 0.0
    %767 = vmatpush.msra.mxu0 0.0
    %768 = vmatpush.msra.mxu0 0.0
    %769 = vmatpush.msra.mxu0 0.0
    %770 = vmatpush.msra.mxu0 0.0
    %771 = vmatpush.msra.mxu0 0.0
    %772 = vmatpush.msra.mxu0 0.0
    %773 = vmatpush.msra.mxu0 %v751
    %774 = vmatpush.msra.mxu0 %v750
    %775 = vmatpush.msra.mxu0 %v749
    %776 = vmatpush.msra.mxu0 %v748
    %777 = vmatmul.f32.gmra.mxu0 %v759
    %v778 = vpop.f32.mrf.mxu0
    %v779 = vadd.f32 %v756, %v778
    %780 = vdwg.mxu0
    %v781 = vmul.f32 %v779, %v779
    %v782 = vmul.f32 %v779, %v781
    %v783 = vmul.f32 %v782, 0.044715
    %v784 = vadd.f32 %v779, %v783
    %v785 = vmul.f32 %v784, 0.7978846
    %v786 = vtanh.pop %v785
    %v787 = vadd.f32 %v786, 1.0
    %v788 = vmul.f32 %v787, 0.5
    %v789 = vmul.f32 %v779, %v788
    %v790 = vsel %vm503, %v789, 0.0
    %791 = vadd.xlane.f32.xlu0 %v790
    %v792 = vpop.xlane.xlu0 %791
    %v793 = vmul.f32 %v789, %v789
    %v794 = vsel %vm503, %v793, 0.0
    %795 = vadd.xlane.f32.xlu0 %v794
    %v796 = vpop.xlane.xlu0 %795
    %v797 = vmul.f32 %v792, 0.03125
    %v798 = vmul.f32 %v796, 0.03125
    %v799 = vmul.f32 %v797, %v797
    %v800 = vsub.f32 %v798, %v799
    %v801 = vsub.f32 %v789, %v797
    %v802 = vadd.f32 %v800, 1e-05
    %v803 = vrsqrt.pop %v802
    %v804 = vmul.f32 %v803, %v802
    %v805 = vmul.f32 %v804, %v803
    %v806 = vmul.f32 0.5, %v805
    %v807 = vsub.f32 1.5, %v806
    %v808 = vmul.f32 %v803, %v807
    %vm809 = vweird.f32 %v802
    %vm810 = vweird.f32 %v803
    %vm811 = vmor %vm809, %vm810
    %v812 = vsel %vm811, %v803, %v808
    %v813 = vmul.f32 %v801, %v812
    %v815 = vperm.slane %v753, 0
    %v817 = vmul.f32 %v813, %v815
    %v819 = vperm.slane %v754, 0
    %v821 = vadd.f32 %v817, %v819
    %v822 = vld [vmem:[%s43] sm:$0xff]
    %v823 = vld [vmem:[%s43 + $0x8] sm:$0xff]
    %v824 = vld [vmem:[%s43 + $0x10] sm:$0xff]
    %v825 = vld [vmem:[%s43 + $0x18] sm:$0xff]
    %v826 = vld [vmem:[%s45] sm:$0x1]
    %v827 = vld [vmem:[%s47] sm:$0x1]
    %v828 = vld [vmem:[%s49] sm:$0x1]
    %v830 = vperm.slane %v826, 0
    %v833 = vsel %vm503, %v821, 0
    %835 = vmatpush.msra.mxu0 0.0
    %836 = vmatpush.msra.mxu0 0.0
    %837 = vmatpush.msra.mxu0 0.0
    %838 = vmatpush.msra.mxu0 0.0
    %839 = vmatpush.msra.mxu0 0.0
    %840 = vmatpush.msra.mxu0 0.0
    %841 = vmatpush.msra.mxu0 0.0
    %842 = vmatpush.msra.mxu0 0.0
    %843 = vmatpush.msra.mxu0 0.0
    %844 = vmatpush.msra.mxu0 0.0
    %845 = vmatpush.msra.mxu0 0.0
    %846 = vmatpush.msra.mxu0 0.0
    %847 = vmatpush.msra.mxu0 %v825
    %848 = vmatpush.msra.mxu0 %v824
    %849 = vmatpush.msra.mxu0 %v823
    %850 = vmatpush.msra.mxu0 %v822
    %851 = vmatmul.f32.gmra.mxu0 %v833
    %v852 = vpop.f32.mrf.mxu0
    %v853 = vadd.f32 %v830, %v852
    %854 = vdwg.mxu0
    %v855 = vmul.f32 %v853, %v853
    %v856 = vmul.f32 %v853, %v855
    %v857 = vmul.f32 %v856, 0.044715
    %v858 = vadd.f32 %v853, %v857
    %v859 = vmul.f32 %v858, 0.7978846
    %v860 = vtanh.pop %v859
    %v861 = vadd.f32 %v860, 1.0
    %v862 = vmul.f32 %v861, 0.5
    %v863 = vmul.f32 %v853, %v862
    %v864 = vsel %vm503, %v863, 0.0
    %865 = vadd.xlane.f32.xlu0 %v864
    %v866 = vpop.xlane.xlu0 %865
    %v867 = vmul.f32 %v863, %v863
    %v868 = vsel %vm503, %v867, 0.0
    %869 = vadd.xlane.f32.xlu0 %v868
    %v870 = vpop.xlane.xlu0 %869
    %v871 = vmul.f32 %v866, 0.03125
    %v872 = vmul.f32 %v870, 0.03125
    %v873 = vmul.f32 %v871, %v871
    %v874 = vsub.f32 %v872, %v873
    %v875 = vsub.f32 %v863, %v871
    %v876 = vadd.f32 %v874, 1e-05
    %v877 = vrsqrt.pop %v876
    %v878 = vmul.f32 %v877, %v876
    %v879 = vmul.f32 %v878, %v877
    %v880 = vmul.f32 0.5, %v879
    %v881 = vsub.f32 1.5, %v880
    %v882 = vmul.f32 %v877, %v881
    %vm883 = vweird.f32 %v876
    %vm884 = vweird.f32 %v877
    %vm885 = vmor %vm883, %vm884
    %v886 = vsel %vm885, %v877, %v882
    %v887 = vmul.f32 %v875, %v886
    %v889 = vperm.slane %v827, 0
    %v891 = vmul.f32 %v887, %v889
    %v893 = vperm.slane %v828, 0
    %v895 = vadd.f32 %v891, %v893
    %896 = vmatpush.msra.mxu0 0.0
    %897 = vmatpush.msra.mxu0 0.0
    %898 = vmatpush.msra.mxu0 0.0
    %899 = vmatpush.msra.mxu0 0.0
    %900 = vmatpush.msra.mxu0 0.0
    %901 = vmatpush.msra.mxu0 0.0
    %902 = vmatpush.msra.mxu0 0.0
    %903 = vmatpush.msra.mxu0 0.0
    %904 = vmatpush.msra.mxu0 0.0
    %905 = vmatpush.msra.mxu0 0.0
    %906 = vmatpush.msra.mxu0 0.0
    %907 = vmatpush.msra.mxu0 0.0
    %908 = vmatpush.msra.mxu0 0.0
    %909 = vmatpush.msra.mxu0 0.0
    %910 = vmatpush.msra.mxu0 0.0
    %911 = vmatpush.msra.mxu0 %v895
    %912 = vmatmul.f32.gmra.mxu0 %v432
    %v913 = vpop.f32.mrf.mxu0
    %v914 = vadd.f32 0.0, %v913
    %915 = vmatmul.f32.gmra.mxu0 %v435
    %v916 = vpop.f32.mrf.mxu0
    %v917 = vadd.f32 0.0, %v916
    %918 = vdwg.mxu0
    %919 = vmatpush.msra.mxu0 0.0
    %920 = vmatpush.msra.mxu0 0.0
    %921 = vmatpush.msra.mxu0 0.0
    %922 = vmatpush.msra.mxu0 0.0
    %923 = vmatpush.msra.mxu0 0.0
    %924 = vmatpush.msra.mxu0 0.0
    %925 = vmatpush.msra.mxu0 0.0
    %926 = vmatpush.msra.mxu0 0.0
    %927 = vmatpush.msra.mxu0 0.0
    %928 = vmatpush.msra.mxu0 0.0
    %929 = vmatpush.msra.mxu0 0.0
    %930 = vmatpush.msra.mxu0 0.0
    %931 = vmatpush.msra.mxu0 0.0
    %932 = vmatpush.msra.mxu0 0.0
    %933 = vmatpush.msra.mxu0 0.0
    %934 = vmatpush.msra.mxu0 %v895
    %935 = vmatmul.f32.gmra.mxu0 %v461
    %v936 = vpop.f32.mrf.mxu0
    %v937 = vadd.f32 0.0, %v936
    %938 = vmatmul.f32.gmra.mxu0 %v464
    %v939 = vpop.f32.mrf.mxu0
    %v940 = vadd.f32 0.0, %v939
    %941 = vdwg.mxu0
    %v942 = vadd.f32 %v722, %v914
    %v943 = vadd.f32 %v723, %v917
    %v944 = vadd.f32 %v942, %v937
    %v945 = vadd.f32 %v943, %v940
    %v946 = vld [vmem:[#allocation2] sm:$0xff]
    %v947 = vld [vmem:[#allocation2 + $0x8] sm:$0xff]
    %v948 = vld [vmem:[#allocation2 + $0x10] sm:$0xff]
    %v949 = vld [vmem:[#allocation2 + $0x18] sm:$0xff]
    %v950 = vld [vmem:[%s53] sm:$0x1]
    %v951 = vld [vmem:[%s55] sm:$0x1]
    %v952 = vld [vmem:[%s57] sm:$0x1]
    %v954 = vperm.slane %v950, 0
    %v957 = vsel %vm503, %v944, 0
    %v960 = vsel %vm503, %v945, 0
    %962 = vmatpush.msra.mxu0 0.0
    %963 = vmatpush.msra.mxu0 0.0
    %964 = vmatpush.msra.mxu0 0.0
    %965 = vmatpush.msra.mxu0 0.0
    %966 = vmatpush.msra.mxu0 0.0
    %967 = vmatpush.msra.mxu0 0.0
    %968 = vmatpush.msra.mxu0 0.0
    %969 = vmatpush.msra.mxu0 0.0
    %970 = vmatpush.msra.mxu0 0.0
    %971 = vmatpush.msra.mxu0 0.0
    %972 = vmatpush.msra.mxu0 0.0
    %973 = vmatpush.msra.mxu0 0.0
    %974 = vmatpush.msra.mxu0 %v949
    %975 = vmatpush.msra.mxu0 %v948
    %976 = vmatpush.msra.mxu0 %v947
    %977 = vmatpush.msra.mxu0 %v946
    %978 = vmatmul.f32.gmra.mxu0 %v957
    %v979 = vpop.f32.mrf.mxu0
    %v980 = vadd.f32 %v954, %v979
    %981 = vmatmul.f32.gmra.mxu0 %v960
    %v982 = vpop.f32.mrf.mxu0
    %v983 = vadd.f32 %v954, %v982
    %984 = vdwg.mxu0
    %v985 = vmul.f32 %v980, %v980
    %v986 = vmul.f32 %v983, %v983
    %v987 = vmul.f32 %v980, %v985
    %v988 = vmul.f32 %v983, %v986
    %v989 = vmul.f32 %v987, 0.044715
    %v990 = vmul.f32 %v988, 0.044715
    %v991 = vadd.f32 %v980, %v989
    %v992 = vadd.f32 %v983, %v990
    %v993 = vmul.f32 %v991, 0.7978846
    %v994 = vmul.f32 %v992, 0.7978846
    %v995 = vtanh.pop %v993
    %v996 = vtanh.pop %v994
    %v997 = vadd.f32 %v995, 1.0
    %v998 = vadd.f32 %v996, 1.0
    %v999 = vmul.f32 %v997, 0.5
    %v1000 = vmul.f32 %v998, 0.5
    %v1001 = vmul.f32 %v980, %v999
    %v1002 = vmul.f32 %v983, %v1000
    %v1003 = vsel %vm503, %v1001, 0.0
    %1004 = vadd.xlane.f32.xlu0 %v1003
    %v1005 = vpop.xlane.xlu0 %1004
    %v1006 = vsel %vm503, %v1002, 0.0
    %1007 = vadd.xlane.f32.xlu0 %v1006
    %v1008 = vpop.xlane.xlu0 %1007
    %v1009 = vmul.f32 %v1001, %v1001
    %v1010 = vmul.f32 %v1002, %v1002
    %v1011 = vsel %vm503, %v1009, 0.0
    %1012 = vadd.xlane.f32.xlu0 %v1011
    %v1013 = vpop.xlane.xlu0 %1012
    %v1014 = vsel %vm503, %v1010, 0.0
    %1015 = vadd.xlane.f32.xlu0 %v1014
    %v1016 = vpop.xlane.xlu0 %1015
    %v1017 = vmul.f32 %v1005, 0.03125
    %v1018 = vmul.f32 %v1008, 0.03125
    %v1019 = vmul.f32 %v1013, 0.03125
    %v1020 = vmul.f32 %v1016, 0.03125
    %v1021 = vmul.f32 %v1017, %v1017
    %v1022 = vmul.f32 %v1018, %v1018
    %v1023 = vsub.f32 %v1019, %v1021
    %v1024 = vsub.f32 %v1020, %v1022
    %v1025 = vsub.f32 %v1001, %v1017
    %v1026 = vsub.f32 %v1002, %v1018
    %v1027 = vadd.f32 %v1023, 1e-05
    %v1028 = vadd.f32 %v1024, 1e-05
    %v1029 = vrsqrt.pop %v1027
    %v1030 = vmul.f32 %v1029, %v1027
    %v1031 = vmul.f32 %v1030, %v1029
    %v1032 = vmul.f32 0.5, %v1031
    %v1033 = vsub.f32 1.5, %v1032
    %v1034 = vmul.f32 %v1029, %v1033
    %vm1035 = vweird.f32 %v1027
    %vm1036 = vweird.f32 %v1029
    %vm1037 = vmor %vm1035, %vm1036
    %v1038 = vsel %vm1037, %v1029, %v1034
    %v1039 = vrsqrt.pop %v1028
    %v1040 = vmul.f32 %v1039, %v1028
    %v1041 = vmul.f32 %v1040, %v1039
    %v1042 = vmul.f32 0.5, %v1041
    %v1043 = vsub.f32 1.5, %v1042
    %v1044 = vmul.f32 %v1039, %v1043
    %vm1045 = vweird.f32 %v1028
    %vm1046 = vweird.f32 %v1039
    %vm1047 = vmor %vm1045, %vm1046
    %v1048 = vsel %vm1047, %v1039, %v1044
    %v1049 = vmul.f32 %v1025, %v1038
    %v1050 = vmul.f32 %v1026, %v1048
    %v1052 = vperm.slane %v951, 0
    %v1054 = vmul.f32 %v1049, %v1052
    %v1055 = vmul.f32 %v1050, %v1052
    %v1057 = vperm.slane %v952, 0
    %v1059 = vadd.f32 %v1054, %v1057
    %v1060 = vadd.f32 %v1055, %v1057
    %v1061 = vld [vmem:[#allocation4] sm:$0xff]
    %v1062 = vld [vmem:[#allocation4 + $0x8] sm:$0xff]
    %v1063 = vld [vmem:[#allocation4 + $0x10] sm:$0xff]
    %v1064 = vld [vmem:[#allocation4 + $0x18] sm:$0xff]
    %v1065 = vld [vmem:[%s61] sm:$0x1]
    %v1066 = vld [vmem:[%s63] sm:$0x1]
    %v1067 = vld [vmem:[%s65] sm:$0x1]
    %v1069 = vperm.slane %v1065, 0
    %v1072 = vsel %vm503, %v1059, 0
    %v1075 = vsel %vm503, %v1060, 0
    %1077 = vmatpush.msra.mxu0 0.0
    %1078 = vmatpush.msra.mxu0 0.0
    %1079 = vmatpush.msra.mxu0 0.0
    %1080 = vmatpush.msra.mxu0 0.0
    %1081 = vmatpush.msra.mxu0 0.0
    %1082 = vmatpush.msra.mxu0 0.0
    %1083 = vmatpush.msra.mxu0 0.0
    %1084 = vmatpush.msra.mxu0 0.0
    %1085 = vmatpush.msra.mxu0 0.0
    %1086 = vmatpush.msra.mxu0 0.0
    %1087 = vmatpush.msra.mxu0 0.0
    %1088 = vmatpush.msra.mxu0 0.0
    %1089 = vmatpush.msra.mxu0 %v1064
    %1090 = vmatpush.msra.mxu0 %v1063
    %1091 = vmatpush.msra.mxu0 %v1062
    %1092 = vmatpush.msra.mxu0 %v1061
    %1093 = vmatmul.f32.gmra.mxu0 %v1072
    %v1094 = vpop.f32.mrf.mxu0
    %v1095 = vadd.f32 %v1069, %v1094
    %1096 = vmatmul.f32.gmra.mxu0 %v1075
    %v1097 = vpop.f32.mrf.mxu0
    %v1098 = vadd.f32 %v1069, %v1097
    %1099 = vdwg.mxu0
    %v1100 = vmul.f32 %v1095, %v1095
    %v1101 = vmul.f32 %v1098, %v1098
    %v1102 = vmul.f32 %v1095, %v1100
    %v1103 = vmul.f32 %v1098, %v1101
    %v1104 = vmul.f32 %v1102, 0.044715
    %v1105 = vmul.f32 %v1103, 0.044715
    %v1106 = vadd.f32 %v1095, %v1104
    %v1107 = vadd.f32 %v1098, %v1105
    %v1108 = vmul.f32 %v1106, 0.7978846
    %v1109 = vmul.f32 %v1107, 0.7978846
    %v1110 = vtanh.pop %v1108
    %v1111 = vtanh.pop %v1109
    %v1112 = vadd.f32 %v1110, 1.0
    %v1113 = vadd.f32 %v1111, 1.0
    %v1114 = vmul.f32 %v1112, 0.5
    %v1115 = vmul.f32 %v1113, 0.5
    %v1116 = vmul.f32 %v1095, %v1114
    %v1117 = vmul.f32 %v1098, %v1115
    %v1118 = vsel %vm503, %v1116, 0.0
    %1119 = vadd.xlane.f32.xlu0 %v1118
    %v1120 = vpop.xlane.xlu0 %1119
    %v1121 = vsel %vm503, %v1117, 0.0
    %1122 = vadd.xlane.f32.xlu0 %v1121
    %v1123 = vpop.xlane.xlu0 %1122
    %v1124 = vmul.f32 %v1116, %v1116
    %v1125 = vmul.f32 %v1117, %v1117
    %v1126 = vsel %vm503, %v1124, 0.0
    %1127 = vadd.xlane.f32.xlu0 %v1126
    %v1128 = vpop.xlane.xlu0 %1127
    %v1129 = vsel %vm503, %v1125, 0.0
    %1130 = vadd.xlane.f32.xlu0 %v1129
    %v1131 = vpop.xlane.xlu0 %1130
    %v1132 = vmul.f32 %v1120, 0.03125
    %v1133 = vmul.f32 %v1123, 0.03125
    %v1134 = vmul.f32 %v1128, 0.03125
    %v1135 = vmul.f32 %v1131, 0.03125
    %v1136 = vmul.f32 %v1132, %v1132
    %v1137 = vmul.f32 %v1133, %v1133
    %v1138 = vsub.f32 %v1134, %v1136
    %v1139 = vsub.f32 %v1135, %v1137
    %v1140 = vsub.f32 %v1116, %v1132
    %v1141 = vsub.f32 %v1117, %v1133
    %v1142 = vadd.f32 %v1138, 1e-05
    %v1143 = vadd.f32 %v1139, 1e-05
    %v1144 = vrsqrt.pop %v1142
    %v1145 = vmul.f32 %v1144, %v1142
    %v1146 = vmul.f32 %v1145, %v1144
    %v1147 = vmul.f32 0.5, %v1146
    %v1148 = vsub.f32 1.5, %v1147
    %v1149 = vmul.f32 %v1144, %v1148
    %vm1150 = vweird.f32 %v1142
    %vm1151 = vweird.f32 %v1144
    %vm1152 = vmor %vm1150, %vm1151
    %v1153 = vsel %vm1152, %v1144, %v1149
    %v1154 = vrsqrt.pop %v1143
    %v1155 = vmul.f32 %v1154, %v1143
    %v1156 = vmul.f32 %v1155, %v1154
    %v1157 = vmul.f32 0.5, %v1156
    %v1158 = vsub.f32 1.5, %v1157
    %v1159 = vmul.f32 %v1154, %v1158
    %vm1160 = vweird.f32 %v1143
    %vm1161 = vweird.f32 %v1154
    %vm1162 = vmor %vm1160, %vm1161
    %v1163 = vsel %vm1162, %v1154, %v1159
    %v1164 = vmul.f32 %v1140, %v1153
    %v1165 = vmul.f32 %v1141, %v1163
    %v1167 = vperm.slane %v1066, 0
    %v1169 = vmul.f32 %v1164, %v1167
    %v1170 = vmul.f32 %v1165, %v1167
    %v1172 = vperm.slane %v1067, 0
    %v1174 = vadd.f32 %v1169, %v1172
    %v1175 = vadd.f32 %v1170, %v1172
    %1176 = vmatpush.msra.mxu0 0.0
    %1177 = vmatpush.msra.mxu0 0.0
    %1178 = vmatpush.msra.mxu0 0.0
    %1179 = vmatpush.msra.mxu0 0.0
    %1180 = vmatpush.msra.mxu0 0.0
    %1181 = vmatpush.msra.mxu0 0.0
    %1182 = vmatpush.msra.mxu0 0.0
    %1183 = vmatpush.msra.mxu0 0.0
    %1184 = vmatpush.msra.mxu0 0.0
    %1185 = vmatpush.msra.mxu0 0.0
    %1186 = vmatpush.msra.mxu0 0.0
    %1187 = vmatpush.msra.mxu0 0.0
    %1188 = vmatpush.msra.mxu0 0.0
    %1189 = vmatpush.msra.mxu0 0.0
    %1190 = vmatpush.msra.mxu0 %v1175
    %1191 = vmatpush.msra.mxu0 %v1174
    %1192 = vmatmul.f32.gmra.mxu0 %v725
    %v1193 = vpop.f32.mrf.mxu0
    %v1194 = vadd.f32 0.0, %v1193
    %1195 = vdwg.mxu0
    %v1196 = vadd.f32 %v895, %v1194
    %v1197 = vld [vmem:[#allocation6] sm:$0xff]
    %v1198 = vld [vmem:[#allocation6 + $0x8] sm:$0xff]
    %v1199 = vld [vmem:[#allocation6 + $0x10] sm:$0xff]
    %v1200 = vld [vmem:[#allocation6 + $0x18] sm:$0xff]
    %v1201 = vld [vmem:[%s69] sm:$0x1]
    %v1202 = vld [vmem:[%s71] sm:$0x1]
    %v1203 = vld [vmem:[%s73] sm:$0x1]
    %v1205 = vperm.slane %v1201, 0
    %v1208 = vsel %vm503, %v1196, 0
    %1210 = vmatpush.msra.mxu0 0.0
    %1211 = vmatpush.msra.mxu0 0.0
    %1212 = vmatpush.msra.mxu0 0.0
    %1213 = vmatpush.msra.mxu0 0.0
    %1214 = vmatpush.msra.mxu0 0.0
    %1215 = vmatpush.msra.mxu0 0.0
    %1216 = vmatpush.msra.mxu0 0.0
    %1217 = vmatpush.msra.mxu0 0.0
    %1218 = vmatpush.msra.mxu0 0.0
    %1219 = vmatpush.msra.mxu0 0.0
    %1220 = vmatpush.msra.mxu0 0.0
    %1221 = vmatpush.msra.mxu0 0.0
    %1222 = vmatpush.msra.mxu0 %v1200
    %1223 = vmatpush.msra.mxu0 %v1199
    %1224 = vmatpush.msra.mxu0 %v1198
    %1225 = vmatpush.msra.mxu0 %v1197
    %1226 = vmatmul.f32.gmra.mxu0 %v1208
    %v1227 = vpop.f32.mrf.mxu0
    %v1228 = vadd.f32 %v1205, %v1227
    %1229 = vdwg.mxu0
    %v1230 = vmul.f32 %v1228, %v1228
    %v1231 = vmul.f32 %v1228, %v1230
    %v1232 = vmul.f32 %v1231, 0.044715
    %v1233 = vadd.f32 %v1228, %v1232
    %v1234 = vmul.f32 %v1233, 0.7978846
    %v1235 = vtanh.pop %v1234
    %v1236 = vadd.f32 %v1235, 1.0
    %v1237 = vmul.f32 %v1236, 0.5
    %v1238 = vmul.f32 %v1228, %v1237
    %v1239 = vsel %vm503, %v1238, 0.0
    %1240 = vadd.xlane.f32.xlu0 %v1239
    %v1241 = vpop.xlane.xlu0 %1240
    %v1242 = vmul.f32 %v1238, %v1238
    %v1243 = vsel %vm503, %v1242, 0.0
    %1244 = vadd.xlane.f32.xlu0 %v1243
    %v1245 = vpop.xlane.xlu0 %1244
    %v1246 = vmul.f32 %v1241, 0.03125
    %v1247 = vmul.f32 %v1245, 0.03125
    %v1248 = vmul.f32 %v1246, %v1246
    %v1249 = vsub.f32 %v1247, %v1248
    %v1250 = vsub.f32 %v1238, %v1246
    %v1251 = vadd.f32 %v1249, 1e-05
    %v1252 = vrsqrt.pop %v1251
    %v1253 = vmul.f32 %v1252, %v1251
    %v1254 = vmul.f32 %v1253, %v1252
    %v1255 = vmul.f32 0.5, %v1254
    %v1256 = vsub.f32 1.5, %v1255
    %v1257 = vmul.f32 %v1252, %v1256
    %vm1258 = vweird.f32 %v1251
    %vm1259 = vweird.f32 %v1252
    %vm1260 = vmor %vm1258, %vm1259
    %v1261 = vsel %vm1260, %v1252, %v1257
    %v1262 = vmul.f32 %v1250, %v1261
    %v1264 = vperm.slane %v1202, 0
    %v1266 = vmul.f32 %v1262, %v1264
    %v1268 = vperm.slane %v1203, 0
    %v1270 = vadd.f32 %v1266, %v1268
    %v1271 = vld [vmem:[#allocation7] sm:$0xff]
    %v1272 = vld [vmem:[#allocation7 + $0x8] sm:$0xff]
    %v1273 = vld [vmem:[#allocation7 + $0x10] sm:$0xff]
    %v1274 = vld [vmem:[#allocation7 + $0x18] sm:$0xff]
    %v1275 = vld [vmem:[#allocation9] sm:$0x1]
    %v1276 = vld [vmem:[#allocation10] sm:$0x1]
    %v1277 = vld [vmem:[#allocation12] sm:$0x1]
    %v1279 = vperm.slane %v1275, 0
    %v1282 = vsel %vm503, %v1270, 0
    %1284 = vmatpush.msra.mxu0 0.0
    %1285 = vmatpush.msra.mxu0 0.0
    %1286 = vmatpush.msra.mxu0 0.0
    %1287 = vmatpush.msra.mxu0 0.0
    %1288 = vmatpush.msra.mxu0 0.0
    %1289 = vmatpush.msra.mxu0 0.0
    %1290 = vmatpush.msra.mxu0 0.0
    %1291 = vmatpush.msra.mxu0 0.0
    %1292 = vmatpush.msra.mxu0 0.0
    %1293 = vmatpush.msra.mxu0 0.0
    %1294 = vmatpush.msra.mxu0 0.0
    %1295 = vmatpush.msra.mxu0 0.0
    %1296 = vmatpush.msra.mxu0 %v1274
    %1297 = vmatpush.msra.mxu0 %v1273
    %1298 = vmatpush.msra.mxu0 %v1272
    %1299 = vmatpush.msra.mxu0 %v1271
    %1300 = vmatmul.f32.gmra.mxu0 %v1282
    %v1301 = vpop.f32.mrf.mxu0
    %v1302 = vadd.f32 %v1279, %v1301
    %1303 = vdwg.mxu0
    %v1304 = vmul.f32 %v1302, %v1302
    %v1305 = vmul.f32 %v1302, %v1304
    %v1306 = vmul.f32 %v1305, 0.044715
    %v1307 = vadd.f32 %v1302, %v1306
    %v1308 = vmul.f32 %v1307, 0.7978846
    %v1309 = vtanh.pop %v1308
    %v1310 = vadd.f32 %v1309, 1.0
    %v1311 = vmul.f32 %v1310, 0.5
    %v1312 = vmul.f32 %v1302, %v1311
    %v1313 = vsel %vm503, %v1312, 0.0
    %1314 = vadd.xlane.f32.xlu0 %v1313
    %v1315 = vpop.xlane.xlu0 %1314
    %v1316 = vmul.f32 %v1312, %v1312
    %v1317 = vsel %vm503, %v1316, 0.0
    %1318 = vadd.xlane.f32.xlu0 %v1317
    %v1319 = vpop.xlane.xlu0 %1318
    %v1320 = vmul.f32 %v1315, 0.03125
    %v1321 = vmul.f32 %v1319, 0.03125
    %v1322 = vmul.f32 %v1320, %v1320
    %v1323 = vsub.f32 %v1321, %v1322
    %v1324 = vsub.f32 %v1312, %v1320
    %v1325 = vadd.f32 %v1323, 1e-05
    %v1326 = vrsqrt.pop %v1325
    %v1327 = vmul.f32 %v1326, %v1325
    %v1328 = vmul.f32 %v1327, %v1326
    %v1329 = vmul.f32 0.5, %v1328
    %v1330 = vsub.f32 1.5, %v1329
    %v1331 = vmul.f32 %v1326, %v1330
    %vm1332 = vweird.f32 %v1325
    %vm1333 = vweird.f32 %v1326
    %vm1334 = vmor %vm1332, %vm1333
    %v1335 = vsel %vm1334, %v1326, %v1331
    %v1336 = vmul.f32 %v1324, %v1335
    %v1338 = vperm.slane %v1276, 0
    %v1340 = vmul.f32 %v1336, %v1338
    %v1342 = vperm.slane %v1277, 0
    %v1344 = vadd.f32 %v1340, %v1342
    %v1345 = vld [vmem:[#allocation13] sm:$0xff]
    %v1346 = vld [vmem:[#allocation13 + $0x8] sm:$0xff]
    %v1347 = vld [vmem:[#allocation13 + $0x10] sm:$0xff]
    %v1348 = vld [vmem:[#allocation13 + $0x18] sm:$0xff]
    %v1349 = vld [vmem:[#allocation15] sm:$0x1]
    %v1350 = vld [vmem:[#allocation16] sm:$0x1]
    %v1351 = vld [vmem:[#allocation18] sm:$0x1]
    %v1353 = vperm.slane %v1349, 0
    %v1356 = vsel %vm503, %v1344, 0
    %1358 = vmatpush.msra.mxu0 0.0
    %1359 = vmatpush.msra.mxu0 0.0
    %1360 = vmatpush.msra.mxu0 0.0
    %1361 = vmatpush.msra.mxu0 0.0
    %1362 = vmatpush.msra.mxu0 0.0
    %1363 = vmatpush.msra.mxu0 0.0
    %1364 = vmatpush.msra.mxu0 0.0
    %1365 = vmatpush.msra.mxu0 0.0
    %1366 = vmatpush.msra.mxu0 0.0
    %1367 = vmatpush.msra.mxu0 0.0
    %1368 = vmatpush.msra.mxu0 0.0
    %1369 = vmatpush.msra.mxu0 0.0
    %1370 = vmatpush.msra.mxu0 %v1348
    %1371 = vmatpush.msra.mxu0 %v1347
    %1372 = vmatpush.msra.mxu0 %v1346
    %1373 = vmatpush.msra.mxu0 %v1345
    %1374 = vmatmul.f32.gmra.mxu0 %v1356
    %v1375 = vpop.f32.mrf.mxu0
    %v1376 = vadd.f32 %v1353, %v1375
    %1377 = vdwg.mxu0
    %v1378 = vmul.f32 %v1376, %v1376
    %v1379 = vmul.f32 %v1376, %v1378
    %v1380 = vmul.f32 %v1379, 0.044715
    %v1381 = vadd.f32 %v1376, %v1380
    %v1382 = vmul.f32 %v1381, 0.7978846
    %v1383 = vtanh.pop %v1382
    %v1384 = vadd.f32 %v1383, 1.0
    %v1385 = vmul.f32 %v1384, 0.5
    %v1386 = vmul.f32 %v1376, %v1385
    %v1387 = vsel %vm503, %v1386, 0.0
    %1388 = vadd.xlane.f32.xlu0 %v1387
    %v1389 = vpop.xlane.xlu0 %1388
    %v1390 = vmul.f32 %v1386, %v1386
    %v1391 = vsel %vm503, %v1390, 0.0
    %1392 = vadd.xlane.f32.xlu0 %v1391
    %v1393 = vpop.xlane.xlu0 %1392
    %v1394 = vmul.f32 %v1389, 0.03125
    %v1395 = vmul.f32 %v1393, 0.03125
    %v1396 = vmul.f32 %v1394, %v1394
    %v1397 = vsub.f32 %v1395, %v1396
    %v1398 = vsub.f32 %v1386, %v1394
    %v1399 = vadd.f32 %v1397, 1e-05
    %v1400 = vrsqrt.pop %v1399
    %v1401 = vmul.f32 %v1400, %v1399
    %v1402 = vmul.f32 %v1401, %v1400
    %v1403 = vmul.f32 0.5, %v1402
    %v1404 = vsub.f32 1.5, %v1403
    %v1405 = vmul.f32 %v1400, %v1404
    %vm1406 = vweird.f32 %v1399
    %vm1407 = vweird.f32 %v1400
    %vm1408 = vmor %vm1406, %vm1407
    %v1409 = vsel %vm1408, %v1400, %v1405
    %v1410 = vmul.f32 %v1398, %v1409
    %v1412 = vperm.slane %v1350, 0
    %v1414 = vmul.f32 %v1410, %v1412
    %v1416 = vperm.slane %v1351, 0
    %v1418 = vadd.f32 %v1414, %v1416
    %v1419 = vld [vmem:[%s91] sm:$0xff]
    %v1420 = vld [vmem:[%s91 + $0x8] sm:$0xff]
    %v1421 = vld [vmem:[%s91 + $0x10] sm:$0xff]
    %v1422 = vld [vmem:[%s91 + $0x18] sm:$0xff]
    %v1423 = vld [vmem:[%s93] sm:$0x1]
    %v1425 = vperm.slane %v1423, 0
    %v1428 = vsel %vm503, %v1418, 0
    %1430 = vmatpush.msra.mxu0 0.0
    %1431 = vmatpush.msra.mxu0 0.0
    %1432 = vmatpush.msra.mxu0 0.0
    %1433 = vmatpush.msra.mxu0 0.0
    %1434 = vmatpush.msra.mxu0 0.0
    %1435 = vmatpush.msra.mxu0 0.0
    %1436 = vmatpush.msra.mxu0 0.0
    %1437 = vmatpush.msra.mxu0 0.0
    %1438 = vmatpush.msra.mxu0 0.0
    %1439 = vmatpush.msra.mxu0 0.0
    %1440 = vmatpush.msra.mxu0 0.0
    %1441 = vmatpush.msra.mxu0 0.0
    %1442 = vmatpush.msra.mxu0 %v1422
    %1443 = vmatpush.msra.mxu0 %v1421
    %1444 = vmatpush.msra.mxu0 %v1420
    %1445 = vmatpush.msra.mxu0 %v1419
    %1446 = vmatmul.f32.gmra.mxu0 %v1428
    %v1447 = vpop.f32.mrf.mxu0
    %v1448 = vadd.f32 %v1425, %v1447
    %1449 = vdwg.mxu0
    %1450 = vst.msk [vmem:[%s95] sm:$0xff] %vm430, %v1448
    // Predicated region
    $region234: #{_lambda_.1} parent=1 // pred_check
      _
    $region235: #{_lambda_.1} parent=1 // pred_check_branch
      %1452 = sbr.rel (0) target = $region237
    $region236: #{_lambda_.1} parent=1 // pred_region
      _
    $region237: #{_lambda_.1} parent=1 // pred_fallthru
      _
    // Predicated region
    $region238: #{_lambda_.1} parent=1 // pred_check
      _
    $region239: #{_lambda_.1} parent=1 // pred_check_branch
      %1454 = sbr.rel (0) target = $region241
    $region240: #{_lambda_.1} parent=1 // pred_region
      _
    $region241: #{_lambda_.1} parent=1 // pred_fallthru
      _
    %1455 = vsyncpa [#allocation3], 1
    %1456 = vsyncpa [#allocation5], 1
    %1457 = vsyncpa [#allocation8], 1
    %1458 = vsyncpa [#allocation11], 1
    %1459 = vsyncpa [#allocation14], 1
    %1460 = vsyncpa [#allocation17], 1

</llo_original>
